<compile_context>
chip_gen: v5e
topology: v5e:2x2
jax: 0.10.0
libtpu: 0.0.40
codegen_flags: <defaults>
</compile_context>

<pallas_src>
import functools

import jax
import jax.numpy as jnp
from jax import lax
from jax.experimental import pallas as pl
from jax.experimental.pallas import tpu as pltpu

BN_EPS = 1e-5


# --------------------------------------------------------------------------- #
# helpers
# --------------------------------------------------------------------------- #
def _round_up(x, m):
    return ((x + m - 1) // m) * m


def _pick_vmem_limit():
    """~96-100 MiB on v5e/v6e (128 MiB physical VMEM), ~48 MiB on v7x (64 MiB)."""
    try:
        cap = int(pltpu.get_tpu_info().vmem_capacity_bytes)
        return max(32 * 1024 * 1024, min(100 * 1024 * 1024, (cap * 3) // 4))
    except Exception:
        return 48 * 1024 * 1024  # safe on every generation


# --------------------------------------------------------------------------- #
# fused ConvGen kernel: J x [upsample->conv->BN->ReLU] + 1x1 head + sigmoid
# --------------------------------------------------------------------------- #
def _convgen_kernel(*refs, n_batch, block_cfgs, has_head, head_bias,
                    apply_sigmoid, matmul_dtype):
    refs = list(refs)
    out_ref = refs.pop()                     # last ref is the output
    it = iter(refs)
    f32 = jnp.float32
    n = n_batch

    def bmm(w2d, x3d):
        # (C_out, C_in) x (N, C_in, T) -> (N, C_out, T); f32 accumulation on MXU.
        wb = jnp.broadcast_to(w2d.astype(matmul_dtype), (n,) + w2d.shape)
        return jnp.einsum("noi,nit->not", wb, x3d,
                          preferred_element_type=jnp.float32)

    cur = next(it)[...].astype(f32)          # (N, C_in_pad, T)

    for cfg in block_cfgs:
        c_out = cfg["c_out"]                 # padded out-channels
        t_out, t_even, t_odd = cfg["t_out"], cfg["t_even"], cfg["t_odd"]
        k_even, k_odd, has_odd = cfg["k_even"], cfg["k_odd"], cfg["has_odd"]

        if cfg["pad_len"] > 0:
            pad3 = next(it)[...].astype(f32)  # (N, C_in_pad, P) left context
            cur = jnp.concatenate([pad3, cur], axis=-1)

        w_ref = next(it)                      # (K, C_out_pad, C_in_pad)
        p_ref = next(it)                      # (C_out_pad, 3) = [bias|gamma|beta]
        cur_mm = cur.astype(matmul_dtype)     # cast once per block for the MXU

        # ---- polyphase conv: even outputs use even taps, odd outputs odd taps;
        #      the inserted zeros are never materialized.  One tap == one
        #      batched matmul against an aligned static slice. ----
        y_even = None
        for m in range(k_even):
            z = bmm(w_ref[2 * m], cur_mm[:, :, m:m + t_even])
            y_even = z if y_even is None else y_even + z
        if has_odd:
            y_odd = None
            for m in range(k_odd):
                z = bmm(w_ref[2 * m + 1], cur_mm[:, :, m + 1:m + 1 + t_odd])
                y_odd = z if y_odd is None else y_odd + z
            if t_odd < t_even:
                y_odd = jnp.concatenate(
                    [y_odd, jnp.zeros((n, c_out, t_even - t_odd), f32)], axis=-1)
        else:
            y_odd = jnp.zeros((n, c_out, t_even), f32)

        # ---- O(T) even/odd re-interleave (lane shuffle), replaces the old
        #      O(T^2) scatter matmuls ----
        y = jnp.stack([y_even, y_odd], axis=-1).reshape(n, c_out, 2 * t_even)
        if 2 * t_even != t_out:
            y = y[:, :, :t_out]

        prm = p_ref[...]
        if cfg["use_bn"]:
            # fused single-pass BN (one sweep for sum & sumsq);
            # conv bias cancels exactly under mean subtraction -> skipped.
            inv_cnt = 1.0 / float(n * t_out)
            s1 = jnp.sum(jnp.sum(y, axis=2, keepdims=True), axis=0, keepdims=True)
            s2 = jnp.sum(jnp.sum(y * y, axis=2, keepdims=True), axis=0, keepdims=True)
            mean = s1 * inv_cnt
            var = jnp.maximum(s2 * inv_cnt - mean * mean, 0.0)
            scale = prm[:, 1:2][None] * lax.rsqrt(var + BN_EPS)
            y = y * scale + (prm[:, 2:3][None] - mean * scale)
        else:
            y = y + prm[:, 0:1][None]
        if cfg["use_relu"]:
            y = jnp.maximum(y, 0.0)
        cur = y

    # ---- optional 1x1 conv head (+bias) and sigmoid ----
    if has_head:
        w1_ref = next(it)
        cur = bmm(w1_ref[...], cur.astype(matmul_dtype))
        if head_bias:
            cur = cur + next(it)[...][None]
    if apply_sigmoid:
        cur = 0.5 * (jnp.tanh(0.5 * cur) + 1.0)   # stable sigmoid (EUP tanh)

    # lane-dense output: pad time to the out block's 128-multiple -> unmasked vst
    t_pad = out_ref.shape[-1]
    t_valid = cur.shape[-1]
    if t_pad > t_valid:
        cur = jnp.concatenate(
            [cur, jnp.zeros(cur.shape[:-1] + (t_pad - t_valid,), f32)], axis=-1)
    out_ref[...] = cur.astype(out_ref.dtype)


# --------------------------------------------------------------------------- #
# parameter init (PyTorch-like defaults)
# --------------------------------------------------------------------------- #
def init_conv_gen_params(key, J, channels_sizes, kernel_size,
                         last_convolution, bias_last_convolution):
    params = {"blocks": {}}
    for j in range(J, 0, -1):
        key, k1, k2 = jax.random.split(key, 3)
        c_in, c_out = channels_sizes[j], channels_sizes[j - 1]
        bound = 1.0 / (c_in * kernel_size) ** 0.5
        params["blocks"][j] = {
            "w": jax.random.uniform(k1, (c_out, c_in, kernel_size), jnp.float32, -bound, bound),
            "b": jax.random.uniform(k2, (c_out,), jnp.float32, -bound, bound),
            "gamma": jnp.ones((c_out,), jnp.float32),   # PyTorch BN defaults
            "beta": jnp.zeros((c_out,), jnp.float32),
        }
    if last_convolution:
        key, k1, k2 = jax.random.split(key, 3)
        c_in, c_out = channels_sizes[0], channels_sizes[-1]
        bound = 1.0 / c_in ** 0.5
        params["conv1x1_w"] = jax.random.uniform(k1, (c_out, c_in), jnp.float32, -bound, bound)
        params["conv1x1_b"] = (
            jax.random.uniform(k2, (c_out,), jnp.float32, -bound, bound)
            if bias_last_convolution else jnp.zeros((c_out,), jnp.float32))
    return params


# --------------------------------------------------------------------------- #
# ConvGen forward: ONE fused pallas_call
# --------------------------------------------------------------------------- #
def conv_gen_forward(params, input_seq, *, J, use_batch_norm=None, relu_last_block=True,
                     last_convolution=False, last_sigmoid=False,
                     bias_last_convolution=True, to_pad_left=None,
                     matmul_dtype=jnp.bfloat16):
    do_bn = ({j: True for j in range(J, 0, -1)} if use_batch_norm is None
             else dict(use_batch_norm))
    do_relu = {j: True for j in range(J, 0, -1)}
    if not relu_last_block:
        do_relu[1] = False
        do_bn[1] = False

    x = input_seq
    if to_pad_left is not None:
        # first block's left context is free XLA glue; inner blocks get theirs
        # as separate kernel inputs (intermediates never leave the kernel).
        x = jnp.concatenate([to_pad_left[J], x], axis=-1)
    n, c0, t0 = x.shape
    c0_p = _round_up(c0, 8)
    x = jnp.pad(x, ((0, 0), (0, c0_p - c0), (0, 0)))        # channel pad to 8x

    inputs = [x]
    cfgs = []
    cur_t, cur_cp, cur_c = t0, c0_p, c0
    for j in range(J, 0, -1):
        p = params["blocks"][j]
        w = p["w"]                                           # (C_out, C_in, K)
        c_out, c_in, k = w.shape
        c_out_p = _round_up(c_out, 8)

        pad_len = 0
        if to_pad_left is not None and j != J:
            padj = to_pad_left[j]                            # (N, C_in, P)
            pad_len = padj.shape[-1]
            inputs.append(jnp.pad(padj, ((0, 0), (0, cur_cp - c_in), (0, 0))))
        t_in = cur_t + pad_len
        t_out = 2 * t_in - k + 1
        t_even = (t_out + 1) // 2
        t_odd = t_out // 2
        k_even = (k + 1) // 2
        k_odd = k // 2
        has_odd = (k_odd > 0) and (t_odd > 0)

        # weights tap-major, channel dims zero-padded to multiples of 8
        w_t = jnp.transpose(w, (2, 0, 1))                    # (K, C_out, C_in)
        inputs.append(jnp.pad(w_t, ((0, 0), (0, c_out_p - c_out), (0, cur_cp - c_in))))
        prm = jnp.stack([p["b"], p["gamma"], p["beta"]], axis=1)   # (C_out, 3)
        inputs.append(jnp.pad(prm, ((0, c_out_p - c_out), (0, 0))))

        cfgs.append(dict(c_out=c_out_p, t_out=t_out, t_even=t_even, t_odd=t_odd,
                         k_even=k_even, k_odd=k_odd, has_odd=has_odd,
                         pad_len=pad_len, use_bn=bool(do_bn[j]),
                         use_relu=bool(do_relu[j])))
        cur_t, cur_cp, cur_c = t_out, c_out_p, c_out

    if last_convolution:
        w1 = params["conv1x1_w"]                             # (C_f, C_0)
        cf, cin1 = w1.shape
        cf_p = _round_up(cf, 8)
        inputs.append(jnp.pad(w1, ((0, cf_p - cf), (0, cur_cp - cin1))))
        if bias_last_convolution:
            inputs.append(jnp.pad(params["conv1x1_b"].reshape(-1, 1),
                                  ((0, cf_p - cf), (0, 0))))
        c_final, c_final_p = cf, cf_p
    else:
        c_final, c_final_p = cur_c, cur_cp

    t_pad = _round_up(cur_t, 128)                            # lane-dense out

    kernel = functools.partial(
        _convgen_kernel, n_batch=n, block_cfgs=tuple(cfgs),
        has_head=last_convolution,
        head_bias=bool(last_convolution and bias_last_convolution),
        apply_sigmoid=last_sigmoid, matmul_dtype=matmul_dtype)

    in_specs = [pl.BlockSpec(a.shape, lambda i, _nd=a.ndim: (0,) * _nd) for a in inputs]
    out3d = pl.pallas_call(
        kernel,
        out_shape=jax.ShapeDtypeStruct((n, c_final_p, t_pad), jnp.float32),
        grid=(1,),
        in_specs=in_specs,
        out_specs=pl.BlockSpec((n, c_final_p, t_pad), lambda i: (0, 0, 0)),
        compiler_params=pltpu.CompilerParams(
            dimension_semantics=("arbitrary",),
            vmem_limit_bytes=_pick_vmem_limit()),
    )(*inputs)

    # strip channel / lane padding (pure XLA glue); layout is already (N, C, T)
    return out3d[:, :c_final, :cur_t]


# --------------------------------------------------------------------------- #
# Pure-JAX reference (for correctness check only)
# --------------------------------------------------------------------------- #
def _ref_block(x, w, b, gamma, beta):
    n, c, t = x.shape
    xu = jnp.stack([x, jnp.zeros_like(x)], axis=-1).reshape(n, c, 2 * t)
    y = jax.lax.conv_general_dilated(
        xu, w, window_strides=(1,), padding="VALID",
        dimension_numbers=("NCH", "OIH", "NCH"),
        precision=jax.lax.Precision.HIGHEST) + b[None, :, None]
    mu = y.mean(axis=(0, 2), keepdims=True)
    var = ((y - mu) ** 2).mean(axis=(0, 2), keepdims=True)
    y = (y - mu) * jax.lax.rsqrt(var + BN_EPS) * gamma[None, :, None] + beta[None, :, None]
    return jnp.maximum(y, 0.0)


def _ref_conv_gen(params, x, *, J, last_convolution, last_sigmoid, bias_last_convolution):
    cur = x
    for j in range(J, 0, -1):
        p = params["blocks"][j]
        cur = _ref_block(cur, p["w"], p["b"], p["gamma"], p["beta"])
    if last_convolution:
        cur = jnp.einsum("oi,nit->not", params["conv1x1_w"], cur,
                         precision=jax.lax.Precision.HIGHEST)
        if bias_last_convolution:
            cur = cur + params["conv1x1_b"][None, :, None]
    if last_sigmoid:
        cur = jax.nn.sigmoid(cur)
    return cur


if __name__ == "__main__":
    key = jax.random.PRNGKey(0)
    J = 2
    channels_sizes = [4, 8, 16]     # indexed by j = 0..J; [-1] feeds the 1x1 head
    kernel_size = 3
    batch, seq = 2, 8
    last_convolution = True
    last_sigmoid = True
    bias_last_convolution = True

    key, pkey, xkey = jax.random.split(key, 3)
    params = init_conv_gen_params(pkey, J, channels_sizes, kernel_size,
                                  last_convolution, bias_last_convolution)
    x = jax.random.normal(xkey, (batch, channels_sizes[J], seq), jnp.float32)

    common = dict(J=J, last_convolution=last_convolution, last_sigmoid=last_sigmoid,
                  bias_last_convolution=bias_last_convolution)

    # f32 MXU operands: tight parity with the pure-JAX reference.
    out_f32 = jax.block_until_ready(
        conv_gen_forward(params, x, matmul_dtype=jnp.float32, **common))
    # default bf16 MXU operands (f32 accumulation): looser tolerance.
    out_bf16 = jax.block_until_ready(conv_gen_forward(params, x, **common))

    # Expected shape: (batch, channels_sizes[-1], 2*(2*seq - K + 1) - K + 1) = (2, 16, 26)
    t_final = 2 * (2 * seq - kernel_size + 1) - kernel_size + 1
    assert out_f32.shape == (batch, channels_sizes[-1], t_final), out_f32.shape
    assert out_bf16.shape == out_f32.shape, out_bf16.shape

    ref = _ref_conv_gen(params, x, J=J,
                        last_convolution=last_convolution,
                        last_sigmoid=last_sigmoid,
                        bias_last_convolution=bias_last_convolution)
    err32 = float(jnp.max(jnp.abs(out_f32 - ref)))
    err16 = float(jnp.max(jnp.abs(out_bf16 - ref)))
    assert jnp.allclose(out_f32, ref, atol=1e-3, rtol=1e-3), err32
    assert jnp.allclose(out_bf16, ref, atol=5e-2, rtol=5e-2), err16
    print("KERNEL_OK")
</pallas_src>

<mosaic_0001>
module attributes {stable_mosaic.version = 11 : i64} {
  func.func @_convgen_kernel(%arg0: i32, %arg1: memref<2x16x8xf32, #tpu.memory_space<vmem>>, %arg2: memref<3x8x16xf32, #tpu.memory_space<vmem>>, %arg3: memref<8x3xf32, #tpu.memory_space<vmem>>, %arg4: memref<3x8x8xf32, #tpu.memory_space<vmem>>, %arg5: memref<8x3xf32, #tpu.memory_space<vmem>>, %arg6: memref<16x8xf32, #tpu.memory_space<vmem>>, %arg7: memref<16x1xf32, #tpu.memory_space<vmem>>, %arg8: memref<2x16x128xf32, #tpu.memory_space<vmem>>) attributes {dimension_semantics = [#tpu.dimension_semantics<arbitrary>], iteration_bounds = array<i64: 1>, scalar_prefetch = 0 : i64, scratch_operands = 0 : i64, tpu.core_type = #tpu.core_type<tc>, window_params = [{pipeline_mode = #tpu.pipeline_mode<synchronous>, transform_indices = @transform_0, window_bounds = array<i64: 2, 16, 8>}, {pipeline_mode = #tpu.pipeline_mode<synchronous>, transform_indices = @transform_1, window_bounds = array<i64: 3, 8, 16>}, {pipeline_mode = #tpu.pipeline_mode<synchronous>, transform_indices = @transform_2, window_bounds = array<i64: 8, 3>}, {pipeline_mode = #tpu.pipeline_mode<synchronous>, transform_indices = @transform_3, window_bounds = array<i64: 3, 8, 8>}, {pipeline_mode = #tpu.pipeline_mode<synchronous>, transform_indices = @transform_4, window_bounds = array<i64: 8, 3>}, {pipeline_mode = #tpu.pipeline_mode<synchronous>, transform_indices = @transform_5, window_bounds = array<i64: 16, 8>}, {pipeline_mode = #tpu.pipeline_mode<synchronous>, transform_indices = @transform_6, window_bounds = array<i64: 16, 1>}, {pipeline_mode = #tpu.pipeline_mode<synchronous>, transform_indices = @transform_7, window_bounds = array<i64: 2, 16, 128>}]} {
    %c0 = arith.constant 0 : index
    %c0_0 = arith.constant 0 : index
    %c0_1 = arith.constant 0 : index
    %0 = vector.load %arg1[%c0, %c0_0, %c0_1] : memref<2x16x8xf32, #tpu.memory_space<vmem>>, vector<2x16x8xf32>
    %c0_2 = arith.constant 0 : index
    %c0_3 = arith.constant 0 : index
    %c0_4 = arith.constant 0 : index
    %1 = vector.load %arg2[%c0_2, %c0_3, %c0_4] : memref<3x8x16xf32, #tpu.memory_space<vmem>>, vector<1x8x16xf32>
    %2 = vector.shape_cast %1 : vector<1x8x16xf32> to vector<8x16xf32>
    %3 = vector.extract_strided_slice %0 {offsets = [0, 0, 0], sizes = [2, 16, 7], strides = [1, 1, 1]} : vector<2x16x8xf32> to vector<2x16x7xf32>
    %4 = vector.shape_cast %2 : vector<8x16xf32> to vector<1x8x16xf32>
    %5 = vector.broadcast %4 : vector<1x8x16xf32> to vector<2x8x16xf32>
    "tpu.trace_start"() <{level = 10 : i32, message = "noi,nit->not"}> : () -> ()
    %cst = arith.constant dense<0.000000e+00> : vector<2x8x7xf32>
    %6 = tpu.matmul %5, %3, %cst {dimension_numbers = #tpu.dot_dimension_numbers<[2], [1], [1], [2], [0, 0, 0, 1, 1, 2], [0], [0]>} : vector<2x8x16xf32>, vector<2x16x7xf32>, vector<2x8x7xf32> -> vector<2x8x7xf32>
    "tpu.trace_stop"() : () -> ()
    %c2 = arith.constant 2 : index
    %c0_5 = arith.constant 0 : index
    %c0_6 = arith.constant 0 : index
    %7 = vector.load %arg2[%c2, %c0_5, %c0_6] : memref<3x8x16xf32, #tpu.memory_space<vmem>>, vector<1x8x16xf32>
    %8 = vector.shape_cast %7 : vector<1x8x16xf32> to vector<8x16xf32>
    %9 = vector.extract_strided_slice %0 {offsets = [0, 0, 1], sizes = [2, 16, 7], strides = [1, 1, 1]} : vector<2x16x8xf32> to vector<2x16x7xf32>
    %10 = vector.shape_cast %8 : vector<8x16xf32> to vector<1x8x16xf32>
    %11 = vector.broadcast %10 : vector<1x8x16xf32> to vector<2x8x16xf32>
    "tpu.trace_start"() <{level = 10 : i32, message = "noi,nit->not"}> : () -> ()
    %cst_7 = arith.constant dense<0.000000e+00> : vector<2x8x7xf32>
    %12 = tpu.matmul %11, %9, %cst_7 {dimension_numbers = #tpu.dot_dimension_numbers<[2], [1], [1], [2], [0, 0, 0, 1, 1, 2], [0], [0]>} : vector<2x8x16xf32>, vector<2x16x7xf32>, vector<2x8x7xf32> -> vector<2x8x7xf32>
    "tpu.trace_stop"() : () -> ()
    %13 = arith.addf %6, %12 : vector<2x8x7xf32>
    %c1 = arith.constant 1 : index
    %c0_8 = arith.constant 0 : index
    %c0_9 = arith.constant 0 : index
    %14 = vector.load %arg2[%c1, %c0_8, %c0_9] : memref<3x8x16xf32, #tpu.memory_space<vmem>>, vector<1x8x16xf32>
    %15 = vector.shape_cast %14 : vector<1x8x16xf32> to vector<8x16xf32>
    %16 = vector.extract_strided_slice %0 {offsets = [0, 0, 1], sizes = [2, 16, 7], strides = [1, 1, 1]} : vector<2x16x8xf32> to vector<2x16x7xf32>
    %17 = vector.shape_cast %15 : vector<8x16xf32> to vector<1x8x16xf32>
    %18 = vector.broadcast %17 : vector<1x8x16xf32> to vector<2x8x16xf32>
    "tpu.trace_start"() <{level = 10 : i32, message = "noi,nit->not"}> : () -> ()
    %cst_10 = arith.constant dense<0.000000e+00> : vector<2x8x7xf32>
    %19 = tpu.matmul %18, %16, %cst_10 {dimension_numbers = #tpu.dot_dimension_numbers<[2], [1], [1], [2], [0, 0, 0, 1, 1, 2], [0], [0]>} : vector<2x8x16xf32>, vector<2x16x7xf32>, vector<2x8x7xf32> -> vector<2x8x7xf32>
    "tpu.trace_stop"() : () -> ()
    %20 = vector.shape_cast %13 : vector<2x8x7xf32> to vector<2x8x7x1xf32>
    %21 = vector.shape_cast %19 : vector<2x8x7xf32> to vector<2x8x7x1xf32>
    %22 = tpu.concatenate %20, %21 in 3 : vector<2x8x7x1xf32>, vector<2x8x7x1xf32> -> vector<2x8x7x2xf32>
    %23 = vector.shape_cast %22 : vector<2x8x7x2xf32> to vector<2x8x14xf32>
    %c0_11 = arith.constant 0 : index
    %c0_12 = arith.constant 0 : index
    %24 = vector.load %arg3[%c0_11, %c0_12] : memref<8x3xf32, #tpu.memory_space<vmem>>, vector<8x3xf32>
    %cst_13 = arith.constant dense<0.000000e+00> : vector<2x8xf32>
    %25 = vector.multi_reduction <add>, %23, %cst_13 [2] : vector<2x8x14xf32> to vector<2x8xf32>
    %26 = vector.shape_cast %25 : vector<2x8xf32> to vector<2x8x1xf32>
    %cst_14 = arith.constant dense<0.000000e+00> : vector<8x1xf32>
    %27 = vector.multi_reduction <add>, %26, %cst_14 [0] : vector<2x8x1xf32> to vector<8x1xf32>
    %28 = vector.shape_cast %27 : vector<8x1xf32> to vector<1x8x1xf32>
    %29 = arith.mulf %23, %23 : vector<2x8x14xf32>
    %cst_15 = arith.constant dense<0.000000e+00> : vector<2x8xf32>
    %30 = vector.multi_reduction <add>, %29, %cst_15 [2] : vector<2x8x14xf32> to vector<2x8xf32>
    %31 = vector.shape_cast %30 : vector<2x8xf32> to vector<2x8x1xf32>
    %cst_16 = arith.constant dense<0.000000e+00> : vector<8x1xf32>
    %32 = vector.multi_reduction <add>, %31, %cst_16 [0] : vector<2x8x1xf32> to vector<8x1xf32>
    %33 = vector.shape_cast %32 : vector<8x1xf32> to vector<1x8x1xf32>
    %cst_17 = arith.constant 0.0357142873 : f32
    %34 = vector.broadcast %cst_17 : f32 to vector<1x8x1xf32>
    %35 = arith.mulf %28, %34 : vector<1x8x1xf32>
    %cst_18 = arith.constant 0.0357142873 : f32
    %36 = vector.broadcast %cst_18 : f32 to vector<1x8x1xf32>
    %37 = arith.mulf %33, %36 : vector<1x8x1xf32>
    %38 = arith.mulf %35, %35 : vector<1x8x1xf32>
    %39 = arith.subf %37, %38 : vector<1x8x1xf32>
    %cst_19 = arith.constant 0.000000e+00 : f32
    %40 = vector.broadcast %cst_19 : f32 to vector<1x8x1xf32>
    %41 = arith.maximumf %39, %40 : vector<1x8x1xf32>
    %42 = vector.extract_strided_slice %24 {offsets = [0, 1], sizes = [8, 1], strides = [1, 1]} : vector<8x3xf32> to vector<8x1xf32>
    %43 = vector.shape_cast %42 : vector<8x1xf32> to vector<1x8x1xf32>
    %cst_20 = arith.constant 9.99999974E-6 : f32
    %44 = vector.broadcast %cst_20 : f32 to vector<1x8x1xf32>
    %45 = arith.addf %41, %44 : vector<1x8x1xf32>
    %46 = math.rsqrt %45 : vector<1x8x1xf32>
    %47 = arith.mulf %43, %46 : vector<1x8x1xf32>
    %48 = vector.broadcast %47 : vector<1x8x1xf32> to vector<2x8x14xf32>
    %49 = arith.mulf %23, %48 : vector<2x8x14xf32>
    %50 = vector.extract_strided_slice %24 {offsets = [0, 2], sizes = [8, 1], strides = [1, 1]} : vector<8x3xf32> to vector<8x1xf32>
    %51 = vector.shape_cast %50 : vector<8x1xf32> to vector<1x8x1xf32>
    %52 = arith.mulf %35, %47 : vector<1x8x1xf32>
    %53 = arith.subf %51, %52 : vector<1x8x1xf32>
    %54 = vector.broadcast %53 : vector<1x8x1xf32> to vector<2x8x14xf32>
    %55 = arith.addf %49, %54 : vector<2x8x14xf32>
    %cst_21 = arith.constant 0.000000e+00 : f32
    %56 = vector.broadcast %cst_21 : f32 to vector<2x8x14xf32>
    %57 = arith.maximumf %55, %56 : vector<2x8x14xf32>
    %c0_22 = arith.constant 0 : index
    %c0_23 = arith.constant 0 : index
    %c0_24 = arith.constant 0 : index
    %58 = vector.load %arg4[%c0_22, %c0_23, %c0_24] : memref<3x8x8xf32, #tpu.memory_space<vmem>>, vector<1x8x8xf32>
    %59 = vector.shape_cast %58 : vector<1x8x8xf32> to vector<8x8xf32>
    %60 = vector.extract_strided_slice %57 {offsets = [0, 0, 0], sizes = [2, 8, 13], strides = [1, 1, 1]} : vector<2x8x14xf32> to vector<2x8x13xf32>
    %61 = vector.shape_cast %59 : vector<8x8xf32> to vector<1x8x8xf32>
    %62 = vector.broadcast %61 : vector<1x8x8xf32> to vector<2x8x8xf32>
    "tpu.trace_start"() <{level = 10 : i32, message = "noi,nit->not"}> : () -> ()
    %cst_25 = arith.constant dense<0.000000e+00> : vector<2x8x13xf32>
    %63 = tpu.matmul %62, %60, %cst_25 {dimension_numbers = #tpu.dot_dimension_numbers<[2], [1], [1], [2], [0, 0, 0, 1, 1, 2], [0], [0]>} : vector<2x8x8xf32>, vector<2x8x13xf32>, vector<2x8x13xf32> -> vector<2x8x13xf32>
    "tpu.trace_stop"() : () -> ()
    %c2_26 = arith.constant 2 : index
    %c0_27 = arith.constant 0 : index
    %c0_28 = arith.constant 0 : index
    %64 = vector.load %arg4[%c2_26, %c0_27, %c0_28] : memref<3x8x8xf32, #tpu.memory_space<vmem>>, vector<1x8x8xf32>
    %65 = vector.shape_cast %64 : vector<1x8x8xf32> to vector<8x8xf32>
    %66 = vector.extract_strided_slice %57 {offsets = [0, 0, 1], sizes = [2, 8, 13], strides = [1, 1, 1]} : vector<2x8x14xf32> to vector<2x8x13xf32>
    %67 = vector.shape_cast %65 : vector<8x8xf32> to vector<1x8x8xf32>
    %68 = vector.broadcast %67 : vector<1x8x8xf32> to vector<2x8x8xf32>
    "tpu.trace_start"() <{level = 10 : i32, message = "noi,nit->not"}> : () -> ()
    %cst_29 = arith.constant dense<0.000000e+00> : vector<2x8x13xf32>
    %69 = tpu.matmul %68, %66, %cst_29 {dimension_numbers = #tpu.dot_dimension_numbers<[2], [1], [1], [2], [0, 0, 0, 1, 1, 2], [0], [0]>} : vector<2x8x8xf32>, vector<2x8x13xf32>, vector<2x8x13xf32> -> vector<2x8x13xf32>
    "tpu.trace_stop"() : () -> ()
    %70 = arith.addf %63, %69 : vector<2x8x13xf32>
    %c1_30 = arith.constant 1 : index
    %c0_31 = arith.constant 0 : index
    %c0_32 = arith.constant 0 : index
    %71 = vector.load %arg4[%c1_30, %c0_31, %c0_32] : memref<3x8x8xf32, #tpu.memory_space<vmem>>, vector<1x8x8xf32>
    %72 = vector.shape_cast %71 : vector<1x8x8xf32> to vector<8x8xf32>
    %73 = vector.extract_strided_slice %57 {offsets = [0, 0, 1], sizes = [2, 8, 13], strides = [1, 1, 1]} : vector<2x8x14xf32> to vector<2x8x13xf32>
    %74 = vector.shape_cast %72 : vector<8x8xf32> to vector<1x8x8xf32>
    %75 = vector.broadcast %74 : vector<1x8x8xf32> to vector<2x8x8xf32>
    "tpu.trace_start"() <{level = 10 : i32, message = "noi,nit->not"}> : () -> ()
    %cst_33 = arith.constant dense<0.000000e+00> : vector<2x8x13xf32>
    %76 = tpu.matmul %75, %73, %cst_33 {dimension_numbers = #tpu.dot_dimension_numbers<[2], [1], [1], [2], [0, 0, 0, 1, 1, 2], [0], [0]>} : vector<2x8x8xf32>, vector<2x8x13xf32>, vector<2x8x13xf32> -> vector<2x8x13xf32>
    "tpu.trace_stop"() : () -> ()
    %77 = vector.shape_cast %70 : vector<2x8x13xf32> to vector<2x8x13x1xf32>
    %78 = vector.shape_cast %76 : vector<2x8x13xf32> to vector<2x8x13x1xf32>
    %79 = tpu.concatenate %77, %78 in 3 : vector<2x8x13x1xf32>, vector<2x8x13x1xf32> -> vector<2x8x13x2xf32>
    %80 = vector.shape_cast %79 : vector<2x8x13x2xf32> to vector<2x8x26xf32>
    %c0_34 = arith.constant 0 : index
    %c0_35 = arith.constant 0 : index
    %81 = vector.load %arg5[%c0_34, %c0_35] : memref<8x3xf32, #tpu.memory_space<vmem>>, vector<8x3xf32>
    %cst_36 = arith.constant dense<0.000000e+00> : vector<2x8xf32>
    %82 = vector.multi_reduction <add>, %80, %cst_36 [2] : vector<2x8x26xf32> to vector<2x8xf32>
    %83 = vector.shape_cast %82 : vector<2x8xf32> to vector<2x8x1xf32>
    %cst_37 = arith.constant dense<0.000000e+00> : vector<8x1xf32>
    %84 = vector.multi_reduction <add>, %83, %cst_37 [0] : vector<2x8x1xf32> to vector<8x1xf32>
    %85 = vector.shape_cast %84 : vector<8x1xf32> to vector<1x8x1xf32>
    %86 = arith.mulf %80, %80 : vector<2x8x26xf32>
    %cst_38 = arith.constant dense<0.000000e+00> : vector<2x8xf32>
    %87 = vector.multi_reduction <add>, %86, %cst_38 [2] : vector<2x8x26xf32> to vector<2x8xf32>
    %88 = vector.shape_cast %87 : vector<2x8xf32> to vector<2x8x1xf32>
    %cst_39 = arith.constant dense<0.000000e+00> : vector<8x1xf32>
    %89 = vector.multi_reduction <add>, %88, %cst_39 [0] : vector<2x8x1xf32> to vector<8x1xf32>
    %90 = vector.shape_cast %89 : vector<8x1xf32> to vector<1x8x1xf32>
    %cst_40 = arith.constant 0.0192307699 : f32
    %91 = vector.broadcast %cst_40 : f32 to vector<1x8x1xf32>
    %92 = arith.mulf %85, %91 : vector<1x8x1xf32>
    %cst_41 = arith.constant 0.0192307699 : f32
    %93 = vector.broadcast %cst_41 : f32 to vector<1x8x1xf32>
    %94 = arith.mulf %90, %93 : vector<1x8x1xf32>
    %95 = arith.mulf %92, %92 : vector<1x8x1xf32>
    %96 = arith.subf %94, %95 : vector<1x8x1xf32>
    %cst_42 = arith.constant 0.000000e+00 : f32
    %97 = vector.broadcast %cst_42 : f32 to vector<1x8x1xf32>
    %98 = arith.maximumf %96, %97 : vector<1x8x1xf32>
    %99 = vector.extract_strided_slice %81 {offsets = [0, 1], sizes = [8, 1], strides = [1, 1]} : vector<8x3xf32> to vector<8x1xf32>
    %100 = vector.shape_cast %99 : vector<8x1xf32> to vector<1x8x1xf32>
    %cst_43 = arith.constant 9.99999974E-6 : f32
    %101 = vector.broadcast %cst_43 : f32 to vector<1x8x1xf32>
    %102 = arith.addf %98, %101 : vector<1x8x1xf32>
    %103 = math.rsqrt %102 : vector<1x8x1xf32>
    %104 = arith.mulf %100, %103 : vector<1x8x1xf32>
    %105 = vector.broadcast %104 : vector<1x8x1xf32> to vector<2x8x26xf32>
    %106 = arith.mulf %80, %105 : vector<2x8x26xf32>
    %107 = vector.extract_strided_slice %81 {offsets = [0, 2], sizes = [8, 1], strides = [1, 1]} : vector<8x3xf32> to vector<8x1xf32>
    %108 = vector.shape_cast %107 : vector<8x1xf32> to vector<1x8x1xf32>
    %109 = arith.mulf %92, %104 : vector<1x8x1xf32>
    %110 = arith.subf %108, %109 : vector<1x8x1xf32>
    %111 = vector.broadcast %110 : vector<1x8x1xf32> to vector<2x8x26xf32>
    %112 = arith.addf %106, %111 : vector<2x8x26xf32>
    %cst_44 = arith.constant 0.000000e+00 : f32
    %113 = vector.broadcast %cst_44 : f32 to vector<2x8x26xf32>
    %114 = arith.maximumf %112, %113 : vector<2x8x26xf32>
    %c0_45 = arith.constant 0 : index
    %c0_46 = arith.constant 0 : index
    %115 = vector.load %arg6[%c0_45, %c0_46] : memref<16x8xf32, #tpu.memory_space<vmem>>, vector<16x8xf32>
    %116 = vector.shape_cast %115 : vector<16x8xf32> to vector<1x16x8xf32>
    %117 = vector.broadcast %116 : vector<1x16x8xf32> to vector<2x16x8xf32>
    "tpu.trace_start"() <{level = 10 : i32, message = "noi,nit->not"}> : () -> ()
    %cst_47 = arith.constant dense<0.000000e+00> : vector<2x16x26xf32>
    %118 = tpu.matmul %117, %114, %cst_47 {dimension_numbers = #tpu.dot_dimension_numbers<[2], [1], [1], [2], [0, 0, 0, 1, 1, 2], [0], [0]>} : vector<2x16x8xf32>, vector<2x8x26xf32>, vector<2x16x26xf32> -> vector<2x16x26xf32>
    "tpu.trace_stop"() : () -> ()
    %c0_48 = arith.constant 0 : index
    %c0_49 = arith.constant 0 : index
    %119 = vector.load %arg7[%c0_48, %c0_49] : memref<16x1xf32, #tpu.memory_space<vmem>>, vector<16x1xf32>
    %120 = vector.shape_cast %119 : vector<16x1xf32> to vector<1x16x1xf32>
    %121 = vector.broadcast %120 : vector<1x16x1xf32> to vector<2x16x26xf32>
    %122 = arith.addf %118, %121 : vector<2x16x26xf32>
    %cst_50 = arith.constant 5.000000e-01 : f32
    %123 = vector.broadcast %cst_50 : f32 to vector<2x16x26xf32>
    %124 = arith.mulf %123, %122 : vector<2x16x26xf32>
    %125 = math.tanh %124 : vector<2x16x26xf32>
    %cst_51 = arith.constant 1.000000e+00 : f32
    %126 = vector.broadcast %cst_51 : f32 to vector<2x16x26xf32>
    %127 = arith.addf %125, %126 : vector<2x16x26xf32>
    %cst_52 = arith.constant 5.000000e-01 : f32
    %128 = vector.broadcast %cst_52 : f32 to vector<2x16x26xf32>
    %129 = arith.mulf %128, %127 : vector<2x16x26xf32>
    %cst_53 = arith.constant 0.000000e+00 : f32
    %130 = vector.broadcast %cst_53 : f32 to vector<2x16x102xf32>
    %131 = tpu.concatenate %129, %130 in 2 : vector<2x16x26xf32>, vector<2x16x102xf32> -> vector<2x16x128xf32>
    %c0_54 = arith.constant 0 : index
    %c0_55 = arith.constant 0 : index
    %c0_56 = arith.constant 0 : index
    %132 = vector.load %arg8[%c0_54, %c0_55, %c0_56] : memref<2x16x128xf32, #tpu.memory_space<vmem>>, vector<2x16x128xf32>
    tpu.vector_store %arg8[%c0_54, %c0_55, %c0_56], %131 {strides = array<i32>} : memref<2x16x128xf32, #tpu.memory_space<vmem>>, vector<2x16x128xf32>,
    return
  }
  func.func @transform_0(%arg0: i32) -> (i32, i32, i32) {
    %c0_i32 = arith.constant 0 : i32
    %c0_i32_0 = arith.constant 0 : i32
    %c0_i32_1 = arith.constant 0 : i32
    %c0_i32_2 = arith.constant 0 : i32
    return %c0_i32, %c0_i32_0, %c0_i32_1 : i32, i32, i32
  }
  func.func @transform_1(%arg0: i32) -> (i32, i32, i32) {
    %c0_i32 = arith.constant 0 : i32
    %c0_i32_0 = arith.constant 0 : i32
    %c0_i32_1 = arith.constant 0 : i32
    %c0_i32_2 = arith.constant 0 : i32
    return %c0_i32, %c0_i32_0, %c0_i32_1 : i32, i32, i32
  }
  func.func @transform_2(%arg0: i32) -> (i32, i32) {
    %c0_i32 = arith.constant 0 : i32
    %c0_i32_0 = arith.constant 0 : i32
    %c0_i32_1 = arith.constant 0 : i32
    return %c0_i32, %c0_i32_0 : i32, i32
  }
  func.func @transform_3(%arg0: i32) -> (i32, i32, i32) {
    %c0_i32 = arith.constant 0 : i32
    %c0_i32_0 = arith.constant 0 : i32
    %c0_i32_1 = arith.constant 0 : i32
    %c0_i32_2 = arith.constant 0 : i32
    return %c0_i32, %c0_i32_0, %c0_i32_1 : i32, i32, i32
  }
  func.func @transform_4(%arg0: i32) -> (i32, i32) {
    %c0_i32 = arith.constant 0 : i32
    %c0_i32_0 = arith.constant 0 : i32
    %c0_i32_1 = arith.constant 0 : i32
    return %c0_i32, %c0_i32_0 : i32, i32
  }
  func.func @transform_5(%arg0: i32) -> (i32, i32) {
    %c0_i32 = arith.constant 0 : i32
    %c0_i32_0 = arith.constant 0 : i32
    %c0_i32_1 = arith.constant 0 : i32
    return %c0_i32, %c0_i32_0 : i32, i32
  }
  func.func @transform_6(%arg0: i32) -> (i32, i32) {
    %c0_i32 = arith.constant 0 : i32
    %c0_i32_0 = arith.constant 0 : i32
    %c0_i32_1 = arith.constant 0 : i32
    return %c0_i32, %c0_i32_0 : i32, i32
  }
  func.func @transform_7(%arg0: i32) -> (i32, i32, i32) {
    %c0_i32 = arith.constant 0 : i32
    %c0_i32_0 = arith.constant 0 : i32
    %c0_i32_1 = arith.constant 0 : i32
    %c0_i32_2 = arith.constant 0 : i32
    return %c0_i32, %c0_i32_0, %c0_i32_1 : i32, i32, i32
  }
}

</mosaic_0001>

<llo_original>
// kernel: tpu_custom_call.1
$region0: #{tpu_custom_call.1}
  #allocation0 [shape = 'u32[]', space=smem, size = 0x4, offset = 0x4, fixed_abs, tag = 'smem constant byte address 0x4 - core index']
  #allocation1 [shape = 'u32[72,128]{1,0:T(1,128)}', space=vmem, size = 0x9000, scoped, tag = 'internal scratch']
  %s0 = inlined_call_operand.vmem [shape: f32[2,16,8], index: 0, kind: input, shape index: {}]
  %s1 = inlined_call_operand.vmem [shape: f32[3,8,16], index: 1, kind: input, shape index: {}]
  %s2 = inlined_call_operand.vmem [shape: f32[8,3], index: 2, kind: input, shape index: {}]
  %s3 = inlined_call_operand.vmem [shape: f32[3,8,8], index: 3, kind: input, shape index: {}]
  %s4 = inlined_call_operand.vmem [shape: f32[8,3], index: 4, kind: input, shape index: {}]
  %s5 = inlined_call_operand.vmem [shape: f32[16,8], index: 5, kind: input, shape index: {}]
  %s6 = inlined_call_operand.vmem [shape: f32[16,1], index: 6, kind: input, shape index: {}]
  %s7 = inlined_call_operand.hbm [shape: f32[2,16,128], index: 7, kind: output, shape index: {}]
  %s8 = sld [smem:[#allocation0]]
  $region38: #{tpu_custom_call.1} parent=0
    _
  %s10 = ssub.s32 1, %s8
  %s11 = scalar_select 0, %s10, %s8
  $region1: #{tpu_custom_call.1} parent=0
    #allocation2 [shape = 'u8[16384]{0}', space=vmem, size = 0x4000, scoped, tag = 'output window, operand 0, single buffered']
    #allocation3 [shape = 's32[1]{0}', space=sflag, size = 0x4, scoped, tag = 'scoped memory for tpu_custom_call.1']
    %12 = vsyncpa [#allocation3], 0
    // Predicated region
    $region2: #{tpu_custom_call.1} parent=1 // pred_check
      _
    $region3: #{tpu_custom_call.1} parent=1 // pred_check_branch
      %14 = sbr.rel (0) target = $region5
    $region4: #{tpu_custom_call.1} parent=1 // pred_region
      _
    $region5: #{tpu_custom_call.1} parent=1 // pred_fallthru
      _
    // Predicated region
    $region6: #{tpu_custom_call.1} parent=1 // pred_check
      _
    $region7: #{tpu_custom_call.1} parent=1 // pred_check_branch
      %16 = sbr.rel (0) target = $region9
    $region8: #{tpu_custom_call.1} parent=1 // pred_region
      _
    $region9: #{tpu_custom_call.1} parent=1 // pred_fallthru
      _
    // Predicated region
    $region10: #{tpu_custom_call.1} parent=1 // pred_check
      _
    $region11: #{tpu_custom_call.1} parent=1 // pred_check_branch
      %18 = sbr.rel (0) target = $region13
    $region12: #{tpu_custom_call.1} parent=1 // pred_region
      _
    $region13: #{tpu_custom_call.1} parent=1 // pred_fallthru
      _
    // Predicated region
    $region14: #{tpu_custom_call.1} parent=1 // pred_check
      _
    $region15: #{tpu_custom_call.1} parent=1 // pred_check_branch
      %20 = sbr.rel (0) target = $region17
    $region16: #{tpu_custom_call.1} parent=1 // pred_region
      _
    $region17: #{tpu_custom_call.1} parent=1 // pred_fallthru
      _
    // Predicated region
    $region18: #{tpu_custom_call.1} parent=1 // pred_check
      _
    $region19: #{tpu_custom_call.1} parent=1 // pred_check_branch
      %22 = sbr.rel (0) target = $region21
    $region20: #{tpu_custom_call.1} parent=1 // pred_region
      _
    $region21: #{tpu_custom_call.1} parent=1 // pred_fallthru
      _
    // Predicated region
    $region22: #{tpu_custom_call.1} parent=1 // pred_check
      _
    $region23: #{tpu_custom_call.1} parent=1 // pred_check_branch
      %24 = sbr.rel (0) target = $region25
    $region24: #{tpu_custom_call.1} parent=1 // pred_region
      _
    $region25: #{tpu_custom_call.1} parent=1 // pred_fallthru
      _
    // Predicated region
    $region26: #{tpu_custom_call.1} parent=1 // pred_check
      _
    $region27: #{tpu_custom_call.1} parent=1 // pred_check_branch
      %26 = sbr.rel (0) target = $region29
    $region28: #{tpu_custom_call.1} parent=1 // pred_region
      _
    $region29: #{tpu_custom_call.1} parent=1 // pred_fallthru
      _
    %v27 = vld [vmem:[%s0] sm:$0xff]
    %v28 = vld [vmem:[%s0 + $0x8] sm:$0xff]
    %v29 = vld [vmem:[%s0 + $0x10] sm:$0xff]
    %v30 = vld [vmem:[%s0 + $0x18] sm:$0xff]
    %v31 = vld [vmem:[%s1] sm:$0xff]
    %s32 = scalar_lea.vmem %s1, 16
    %v33 = vld [vmem:[%s32] sm:$0xff]
    %36 = vrot.lane.b32.xlu0 %v27, 127
    %v37 = vpop.permute.xlu0 %36
    %38 = vrot.lane.b32.xlu0 %v28, 127
    %v39 = vpop.permute.xlu0 %38
    %vm42 = vcmask 130048
    %v44 = vsel %vm42, %v33, 0
    %46 = vmatpush.msra.mxu0 0.0
    %47 = vmatpush.msra.mxu0 0.0
    %48 = vmatpush.msra.mxu0 0.0
    %49 = vmatpush.msra.mxu0 0.0
    %50 = vmatpush.msra.mxu0 0.0
    %51 = vmatpush.msra.mxu0 0.0
    %52 = vmatpush.msra.mxu0 0.0
    %53 = vmatpush.msra.mxu0 0.0
    %54 = vmatpush.msra.mxu0 0.0
    %55 = vmatpush.msra.mxu0 0.0
    %56 = vmatpush.msra.mxu0 0.0
    %57 = vmatpush.msra.mxu0 0.0
    %58 = vmatpush.msra.mxu0 0.0
    %59 = vmatpush.msra.mxu0 0.0
    %60 = vmatpush.msra.mxu0 %v39
    %61 = vmatpush.msra.mxu0 %v37
    %62 = vmatmul.f32.gmra.mxu0 %v44
    %v63 = vpop.f32.mrf.mxu0
    %v64 = vadd.f32 0.0, %v63
    %65 = vdwg.mxu0
    %68 = vrot.lane.b32.xlu0 %v29, 127
    %v69 = vpop.permute.xlu0 %68
    %70 = vrot.lane.b32.xlu0 %v30, 127
    %v71 = vpop.permute.xlu0 %70
    %74 = vmatpush.msra.mxu0 0.0
    %75 = vmatpush.msra.mxu0 0.0
    %76 = vmatpush.msra.mxu0 0.0
    %77 = vmatpush.msra.mxu0 0.0
    %78 = vmatpush.msra.mxu0 0.0
    %79 = vmatpush.msra.mxu0 0.0
    %80 = vmatpush.msra.mxu0 0.0
    %81 = vmatpush.msra.mxu0 0.0
    %82 = vmatpush.msra.mxu0 0.0
    %83 = vmatpush.msra.mxu0 0.0
    %84 = vmatpush.msra.mxu0 0.0
    %85 = vmatpush.msra.mxu0 0.0
    %86 = vmatpush.msra.mxu0 0.0
    %87 = vmatpush.msra.mxu0 0.0
    %88 = vmatpush.msra.mxu0 %v71
    %89 = vmatpush.msra.mxu0 %v69
    %90 = vmatmul.f32.gmra.mxu0 %v44
    %v91 = vpop.f32.mrf.mxu0
    %v92 = vadd.f32 0.0, %v91
    %93 = vdwg.mxu0
    %v95 = vsel %vm42, %v31, 0
    %97 = vmatpush.msra.mxu0 0.0
    %98 = vmatpush.msra.mxu0 0.0
    %99 = vmatpush.msra.mxu0 0.0
    %100 = vmatpush.msra.mxu0 0.0
    %101 = vmatpush.msra.mxu0 0.0
    %102 = vmatpush.msra.mxu0 0.0
    %103 = vmatpush.msra.mxu0 0.0
    %104 = vmatpush.msra.mxu0 0.0
    %105 = vmatpush.msra.mxu0 0.0
    %106 = vmatpush.msra.mxu0 0.0
    %107 = vmatpush.msra.mxu0 0.0
    %108 = vmatpush.msra.mxu0 0.0
    %109 = vmatpush.msra.mxu0 0.0
    %110 = vmatpush.msra.mxu0 0.0
    %111 = vmatpush.msra.mxu0 %v28
    %112 = vmatpush.msra.mxu0 %v27
    %113 = vmatmul.f32.gmra.mxu0 %v95
    %v114 = vpop.f32.mrf.mxu0
    %v115 = vadd.f32 %v64, %v114
    %116 = vdwg.mxu0
    %117 = vmatpush.msra.mxu0 0.0
    %118 = vmatpush.msra.mxu0 0.0
    %119 = vmatpush.msra.mxu0 0.0
    %120 = vmatpush.msra.mxu0 0.0
    %121 = vmatpush.msra.mxu0 0.0
    %122 = vmatpush.msra.mxu0 0.0
    %123 = vmatpush.msra.mxu0 0.0
    %124 = vmatpush.msra.mxu0 0.0
    %125 = vmatpush.msra.mxu0 0.0
    %126 = vmatpush.msra.mxu0 0.0
    %127 = vmatpush.msra.mxu0 0.0
    %128 = vmatpush.msra.mxu0 0.0
    %129 = vmatpush.msra.mxu0 0.0
    %130 = vmatpush.msra.mxu0 0.0
    %131 = vmatpush.msra.mxu0 %v30
    %132 = vmatpush.msra.mxu0 %v29
    %133 = vmatmul.f32.gmra.mxu0 %v95
    %v134 = vpop.f32.mrf.mxu0
    %v135 = vadd.f32 %v92, %v134
    %136 = vdwg.mxu0
    %s137 = scalar_lea.vmem %s1, 8
    %v138 = vld [vmem:[%s137] sm:$0xff]
    %v140 = vsel %vm42, %v138, 0
    %142 = vmatpush.msra.mxu0 0.0
    %143 = vmatpush.msra.mxu0 0.0
    %144 = vmatpush.msra.mxu0 0.0
    %145 = vmatpush.msra.mxu0 0.0
    %146 = vmatpush.msra.mxu0 0.0
    %147 = vmatpush.msra.mxu0 0.0
    %148 = vmatpush.msra.mxu0 0.0
    %149 = vmatpush.msra.mxu0 0.0
    %150 = vmatpush.msra.mxu0 0.0
    %151 = vmatpush.msra.mxu0 0.0
    %152 = vmatpush.msra.mxu0 0.0
    %153 = vmatpush.msra.mxu0 0.0
    %154 = vmatpush.msra.mxu0 0.0
    %155 = vmatpush.msra.mxu0 0.0
    %156 = vmatpush.msra.mxu0 %v39
    %157 = vmatpush.msra.mxu0 %v37
    %158 = vmatmul.f32.gmra.mxu0 %v140
    %v159 = vpop.f32.mrf.mxu0
    %v160 = vadd.f32 0.0, %v159
    %161 = vdwg.mxu0
    %162 = vmatpush.msra.mxu0 0.0
    %163 = vmatpush.msra.mxu0 0.0
    %164 = vmatpush.msra.mxu0 0.0
    %165 = vmatpush.msra.mxu0 0.0
    %166 = vmatpush.msra.mxu0 0.0
    %167 = vmatpush.msra.mxu0 0.0
    %168 = vmatpush.msra.mxu0 0.0
    %169 = vmatpush.msra.mxu0 0.0
    %170 = vmatpush.msra.mxu0 0.0
    %171 = vmatpush.msra.mxu0 0.0
    %172 = vmatpush.msra.mxu0 0.0
    %173 = vmatpush.msra.mxu0 0.0
    %174 = vmatpush.msra.mxu0 0.0
    %175 = vmatpush.msra.mxu0 0.0
    %176 = vmatpush.msra.mxu0 %v71
    %177 = vmatpush.msra.mxu0 %v69
    %178 = vmatmul.f32.gmra.mxu0 %v140
    %v179 = vpop.f32.mrf.mxu0
    %v180 = vadd.f32 0.0, %v179
    %181 = vdwg.mxu0
    %v182 = vperm.slane %v115, 0
    %v183 = vlaneseq
    %v184 = vshrl.u32 %v183, 7
    %186 = vset.pattern.permute.xlu0 %v184
    %187 = vperm.xlu0 %186, %v182
    %v188 = vpop.permute.xlu0 %187
    %v189 = vperm.slane %v115, 1
    %v190 = vlaneseq
    %v191 = vshrl.u32 %v190, 7
    %193 = vset.pattern.permute.xlu0 %v191
    %194 = vperm.xlu0 %193, %v189
    %v195 = vpop.permute.xlu0 %194
    %v196 = vperm.slane %v115, 2
    %v197 = vlaneseq
    %v198 = vshrl.u32 %v197, 7
    %200 = vset.pattern.permute.xlu0 %v198
    %201 = vperm.xlu0 %200, %v196
    %v202 = vpop.permute.xlu0 %201
    %v203 = vperm.slane %v115, 3
    %v204 = vlaneseq
    %v205 = vshrl.u32 %v204, 7
    %207 = vset.pattern.permute.xlu0 %v205
    %208 = vperm.xlu0 %207, %v203
    %v209 = vpop.permute.xlu0 %208
    %v210 = vperm.slane %v115, 4
    %v211 = vlaneseq
    %v212 = vshrl.u32 %v211, 7
    %214 = vset.pattern.permute.xlu0 %v212
    %215 = vperm.xlu0 %214, %v210
    %v216 = vpop.permute.xlu0 %215
    %v217 = vperm.slane %v115, 5
    %v218 = vlaneseq
    %v219 = vshrl.u32 %v218, 7
    %221 = vset.pattern.permute.xlu0 %v219
    %222 = vperm.xlu0 %221, %v217
    %v223 = vpop.permute.xlu0 %222
    %v224 = vperm.slane %v115, 6
    %v225 = vlaneseq
    %v226 = vshrl.u32 %v225, 7
    %228 = vset.pattern.permute.xlu0 %v226
    %229 = vperm.xlu0 %228, %v224
    %v230 = vpop.permute.xlu0 %229
    %v231 = vperm.slane %v115, 7
    %v232 = vlaneseq
    %v233 = vshrl.u32 %v232, 7
    %235 = vset.pattern.permute.xlu0 %v233
    %236 = vperm.xlu0 %235, %v231
    %v237 = vpop.permute.xlu0 %236
    %v238 = vperm.slane %v135, 0
    %v239 = vlaneseq
    %v240 = vshrl.u32 %v239, 7
    %242 = vset.pattern.permute.xlu0 %v240
    %243 = vperm.xlu0 %242, %v238
    %v244 = vpop.permute.xlu0 %243
    %v245 = vperm.slane %v135, 1
    %v246 = vlaneseq
    %v247 = vshrl.u32 %v246, 7
    %249 = vset.pattern.permute.xlu0 %v247
    %250 = vperm.xlu0 %249, %v245
    %v251 = vpop.permute.xlu0 %250
    %v252 = vperm.slane %v135, 2
    %v253 = vlaneseq
    %v254 = vshrl.u32 %v253, 7
    %256 = vset.pattern.permute.xlu0 %v254
    %257 = vperm.xlu0 %256, %v252
    %v258 = vpop.permute.xlu0 %257
    %v259 = vperm.slane %v135, 3
    %v260 = vlaneseq
    %v261 = vshrl.u32 %v260, 7
    %263 = vset.pattern.permute.xlu0 %v261
    %264 = vperm.xlu0 %263, %v259
    %v265 = vpop.permute.xlu0 %264
    %v266 = vperm.slane %v135, 4
    %v267 = vlaneseq
    %v268 = vshrl.u32 %v267, 7
    %270 = vset.pattern.permute.xlu0 %v268
    %271 = vperm.xlu0 %270, %v266
    %v272 = vpop.permute.xlu0 %271
    %v273 = vperm.slane %v135, 5
    %v274 = vlaneseq
    %v275 = vshrl.u32 %v274, 7
    %277 = vset.pattern.permute.xlu0 %v275
    %278 = vperm.xlu0 %277, %v273
    %v279 = vpop.permute.xlu0 %278
    %v280 = vperm.slane %v135, 6
    %v281 = vlaneseq
    %v282 = vshrl.u32 %v281, 7
    %284 = vset.pattern.permute.xlu0 %v282
    %285 = vperm.xlu0 %284, %v280
    %v286 = vpop.permute.xlu0 %285
    %v287 = vperm.slane %v135, 7
    %v288 = vlaneseq
    %v289 = vshrl.u32 %v288, 7
    %291 = vset.pattern.permute.xlu0 %v289
    %292 = vperm.xlu0 %291, %v287
    %v293 = vpop.permute.xlu0 %292
    %v294 = vperm.slane %v160, 0
    %v295 = vlaneseq
    %v296 = vshrl.u32 %v295, 7
    %298 = vset.pattern.permute.xlu0 %v296
    %299 = vperm.xlu0 %298, %v294
    %v300 = vpop.permute.xlu0 %299
    %v301 = vperm.slane %v160, 1
    %v302 = vlaneseq
    %v303 = vshrl.u32 %v302, 7
    %305 = vset.pattern.permute.xlu0 %v303
    %306 = vperm.xlu0 %305, %v301
    %v307 = vpop.permute.xlu0 %306
    %v308 = vperm.slane %v160, 2
    %v309 = vlaneseq
    %v310 = vshrl.u32 %v309, 7
    %312 = vset.pattern.permute.xlu0 %v310
    %313 = vperm.xlu0 %312, %v308
    %v314 = vpop.permute.xlu0 %313
    %v315 = vperm.slane %v160, 3
    %v316 = vlaneseq
    %v317 = vshrl.u32 %v316, 7
    %319 = vset.pattern.permute.xlu0 %v317
    %320 = vperm.xlu0 %319, %v315
    %v321 = vpop.permute.xlu0 %320
    %v322 = vperm.slane %v160, 4
    %v323 = vlaneseq
    %v324 = vshrl.u32 %v323, 7
    %326 = vset.pattern.permute.xlu0 %v324
    %327 = vperm.xlu0 %326, %v322
    %v328 = vpop.permute.xlu0 %327
    %v329 = vperm.slane %v160, 5
    %v330 = vlaneseq
    %v331 = vshrl.u32 %v330, 7
    %333 = vset.pattern.permute.xlu0 %v331
    %334 = vperm.xlu0 %333, %v329
    %v335 = vpop.permute.xlu0 %334
    %v336 = vperm.slane %v160, 6
    %v337 = vlaneseq
    %v338 = vshrl.u32 %v337, 7
    %340 = vset.pattern.permute.xlu0 %v338
    %341 = vperm.xlu0 %340, %v336
    %v342 = vpop.permute.xlu0 %341
    %v343 = vperm.slane %v160, 7
    %v344 = vlaneseq
    %v345 = vshrl.u32 %v344, 7
    %347 = vset.pattern.permute.xlu0 %v345
    %348 = vperm.xlu0 %347, %v343
    %v349 = vpop.permute.xlu0 %348
    %v350 = vperm.slane %v180, 0
    %v351 = vlaneseq
    %v352 = vshrl.u32 %v351, 7
    %354 = vset.pattern.permute.xlu0 %v352
    %355 = vperm.xlu0 %354, %v350
    %v356 = vpop.permute.xlu0 %355
    %v357 = vperm.slane %v180, 1
    %v358 = vlaneseq
    %v359 = vshrl.u32 %v358, 7
    %361 = vset.pattern.permute.xlu0 %v359
    %362 = vperm.xlu0 %361, %v357
    %v363 = vpop.permute.xlu0 %362
    %v364 = vperm.slane %v180, 2
    %v365 = vlaneseq
    %v366 = vshrl.u32 %v365, 7
    %368 = vset.pattern.permute.xlu0 %v366
    %369 = vperm.xlu0 %368, %v364
    %v370 = vpop.permute.xlu0 %369
    %v371 = vperm.slane %v180, 3
    %v372 = vlaneseq
    %v373 = vshrl.u32 %v372, 7
    %375 = vset.pattern.permute.xlu0 %v373
    %376 = vperm.xlu0 %375, %v371
    %v377 = vpop.permute.xlu0 %376
    %v378 = vperm.slane %v180, 4
    %v379 = vlaneseq
    %v380 = vshrl.u32 %v379, 7
    %382 = vset.pattern.permute.xlu0 %v380
    %383 = vperm.xlu0 %382, %v378
    %v384 = vpop.permute.xlu0 %383
    %v385 = vperm.slane %v180, 5
    %v386 = vlaneseq
    %v387 = vshrl.u32 %v386, 7
    %389 = vset.pattern.permute.xlu0 %v387
    %390 = vperm.xlu0 %389, %v385
    %v391 = vpop.permute.xlu0 %390
    %v392 = vperm.slane %v180, 6
    %v393 = vlaneseq
    %v394 = vshrl.u32 %v393, 7
    %396 = vset.pattern.permute.xlu0 %v394
    %397 = vperm.xlu0 %396, %v392
    %v398 = vpop.permute.xlu0 %397
    %v399 = vperm.slane %v180, 7
    %v400 = vlaneseq
    %v401 = vshrl.u32 %v400, 7
    %403 = vset.pattern.permute.xlu0 %v401
    %404 = vperm.xlu0 %403, %v399
    %v405 = vpop.permute.xlu0 %404
    %vm406 = vcmask 7168
    %v407 = vsel %vm406, %v188, %v300
    %v408 = vsel %vm406, %v195, %v307
    %v409 = vsel %vm406, %v202, %v314
    %v410 = vsel %vm406, %v209, %v321
    %v411 = vsel %vm406, %v216, %v328
    %v412 = vsel %vm406, %v223, %v335
    %v413 = vsel %vm406, %v230, %v342
    %v414 = vsel %vm406, %v237, %v349
    %v415 = vsel %vm406, %v244, %v356
    %v416 = vsel %vm406, %v251, %v363
    %v417 = vsel %vm406, %v258, %v370
    %v418 = vsel %vm406, %v265, %v377
    %v419 = vsel %vm406, %v272, %v384
    %v420 = vsel %vm406, %v279, %v391
    %v421 = vsel %vm406, %v286, %v398
    %v422 = vsel %vm406, %v293, %v405
    %v423 = vrot.slane %v409, 4
    %vm424 = vcmask 1047556
    %v425 = vsel %vm424, %v423, %v407
    %v426 = vrot.slane %v407, 4
    %v427 = vsel %vm424, %v409, %v426
    %v429 = vunpack.c.l.s4 1983009808
    %v430 = vunpack.c.0.s8 %v429
    %v431 = vperm.slane %v425, %v430
    %v433 = vunpack.c.l.s4 1983009808
    %v434 = vunpack.c.0.s8 %v433
    %v435 = vperm.slane %v427, %v434
    %v436 = vrot.slane %v410, 4
    %v437 = vsel %vm424, %v436, %v408
    %v438 = vrot.slane %v408, 4
    %v439 = vsel %vm424, %v410, %v438
    %v441 = vunpack.c.l.s4 1983009808
    %v442 = vunpack.c.0.s8 %v441
    %v443 = vperm.slane %v437, %v442
    %v445 = vunpack.c.l.s4 1983009808
    %v446 = vunpack.c.0.s8 %v445
    %v447 = vperm.slane %v439, %v446
    %v448 = vrot.slane %v413, 4
    %v449 = vsel %vm424, %v448, %v411
    %v450 = vrot.slane %v411, 4
    %v451 = vsel %vm424, %v413, %v450
    %v453 = vunpack.c.l.s4 1983009808
    %v454 = vunpack.c.0.s8 %v453
    %v455 = vperm.slane %v449, %v454
    %v457 = vunpack.c.l.s4 1983009808
    %v458 = vunpack.c.0.s8 %v457
    %v459 = vperm.slane %v451, %v458
    %v460 = vrot.slane %v414, 4
    %v461 = vsel %vm424, %v460, %v412
    %v462 = vrot.slane %v412, 4
    %v463 = vsel %vm424, %v414, %v462
    %v465 = vunpack.c.l.s4 1983009808
    %v466 = vunpack.c.0.s8 %v465
    %v467 = vperm.slane %v461, %v466
    %v469 = vunpack.c.l.s4 1983009808
    %v470 = vunpack.c.0.s8 %v469
    %v471 = vperm.slane %v463, %v470
    %v472 = vrot.slane %v443, 4
    %v473 = vsel %vm424, %v472, %v431
    %v474 = vrot.slane %v431, 4
    %v475 = vsel %vm424, %v443, %v474
    %v477 = vunpack.c.l.s4 1934713408
    %v478 = vunpack.c.0.s8 %v477
    %v479 = vperm.slane %v473, %v478
    %v481 = vunpack.c.l.s4 1934713408
    %v482 = vunpack.c.0.s8 %v481
    %v483 = vperm.slane %v475, %v482
    %v484 = vrot.slane %v447, 4
    %v485 = vsel %vm424, %v484, %v435
    %v486 = vrot.slane %v435, 4
    %v487 = vsel %vm424, %v447, %v486
    %v489 = vunpack.c.l.s4 1934713408
    %v490 = vunpack.c.0.s8 %v489
    %v491 = vperm.slane %v485, %v490
    %v493 = vunpack.c.l.s4 1934713408
    %v494 = vunpack.c.0.s8 %v493
    %v495 = vperm.slane %v487, %v494
    %v496 = vrot.slane %v467, 4
    %v497 = vsel %vm424, %v496, %v455
    %v498 = vrot.slane %v455, 4
    %v499 = vsel %vm424, %v467, %v498
    %v501 = vunpack.c.l.s4 1934713408
    %v502 = vunpack.c.0.s8 %v501
    %v503 = vperm.slane %v497, %v502
    %v505 = vunpack.c.l.s4 1934713408
    %v506 = vunpack.c.0.s8 %v505
    %v507 = vperm.slane %v499, %v506
    %v508 = vrot.slane %v471, 4
    %v509 = vsel %vm424, %v508, %v459
    %v510 = vrot.slane %v459, 4
    %v511 = vsel %vm424, %v471, %v510
    %v513 = vunpack.c.l.s4 1934713408
    %v514 = vunpack.c.0.s8 %v513
    %v515 = vperm.slane %v509, %v514
    %v517 = vunpack.c.l.s4 1934713408
    %v518 = vunpack.c.0.s8 %v517
    %v519 = vperm.slane %v511, %v518
    %v520 = vrot.slane %v503, 4
    %v521 = vsel %vm424, %v520, %v479
    %v522 = vrot.slane %v479, 4
    %v523 = vsel %vm424, %v503, %v522
    %v524 = vrot.slane %v507, 4
    %v525 = vsel %vm424, %v524, %v483
    %v526 = vrot.slane %v483, 4
    %v527 = vsel %vm424, %v507, %v526
    %v528 = vrot.slane %v515, 4
    %v529 = vsel %vm424, %v528, %v491
    %v530 = vrot.slane %v491, 4
    %v531 = vsel %vm424, %v515, %v530
    %v532 = vrot.slane %v519, 4
    %v533 = vsel %vm424, %v532, %v495
    %v534 = vrot.slane %v417, 4
    %v535 = vsel %vm424, %v534, %v415
    %v536 = vrot.slane %v415, 4
    %v537 = vsel %vm424, %v417, %v536
    %v539 = vunpack.c.l.s4 1983009808
    %v540 = vunpack.c.0.s8 %v539
    %v541 = vperm.slane %v535, %v540
    %v543 = vunpack.c.l.s4 1983009808
    %v544 = vunpack.c.0.s8 %v543
    %v545 = vperm.slane %v537, %v544
    %v546 = vrot.slane %v418, 4
    %v547 = vsel %vm424, %v546, %v416
    %v548 = vrot.slane %v416, 4
    %v549 = vsel %vm424, %v418, %v548
    %v551 = vunpack.c.l.s4 1983009808
    %v552 = vunpack.c.0.s8 %v551
    %v553 = vperm.slane %v547, %v552
    %v555 = vunpack.c.l.s4 1983009808
    %v556 = vunpack.c.0.s8 %v555
    %v557 = vperm.slane %v549, %v556
    %v558 = vrot.slane %v421, 4
    %v559 = vsel %vm424, %v558, %v419
    %v560 = vrot.slane %v419, 4
    %v561 = vsel %vm424, %v421, %v560
    %v563 = vunpack.c.l.s4 1983009808
    %v564 = vunpack.c.0.s8 %v563
    %v565 = vperm.slane %v559, %v564
    %v567 = vunpack.c.l.s4 1983009808
    %v568 = vunpack.c.0.s8 %v567
    %v569 = vperm.slane %v561, %v568
    %v570 = vrot.slane %v422, 4
    %v571 = vsel %vm424, %v570, %v420
    %v572 = vrot.slane %v420, 4
    %v573 = vsel %vm424, %v422, %v572
    %v575 = vunpack.c.l.s4 1983009808
    %v576 = vunpack.c.0.s8 %v575
    %v577 = vperm.slane %v571, %v576
    %v579 = vunpack.c.l.s4 1983009808
    %v580 = vunpack.c.0.s8 %v579
    %v581 = vperm.slane %v573, %v580
    %v582 = vrot.slane %v553, 4
    %v583 = vsel %vm424, %v582, %v541
    %v584 = vrot.slane %v541, 4
    %v585 = vsel %vm424, %v553, %v584
    %v587 = vunpack.c.l.s4 1934713408
    %v588 = vunpack.c.0.s8 %v587
    %v589 = vperm.slane %v583, %v588
    %v591 = vunpack.c.l.s4 1934713408
    %v592 = vunpack.c.0.s8 %v591
    %v593 = vperm.slane %v585, %v592
    %v594 = vrot.slane %v557, 4
    %v595 = vsel %vm424, %v594, %v545
    %v596 = vrot.slane %v545, 4
    %v597 = vsel %vm424, %v557, %v596
    %v599 = vunpack.c.l.s4 1934713408
    %v600 = vunpack.c.0.s8 %v599
    %v601 = vperm.slane %v595, %v600
    %v603 = vunpack.c.l.s4 1934713408
    %v604 = vunpack.c.0.s8 %v603
    %v605 = vperm.slane %v597, %v604
    %v606 = vrot.slane %v577, 4
    %v607 = vsel %vm424, %v606, %v565
    %v608 = vrot.slane %v565, 4
    %v609 = vsel %vm424, %v577, %v608
    %v611 = vunpack.c.l.s4 1934713408
    %v612 = vunpack.c.0.s8 %v611
    %v613 = vperm.slane %v607, %v612
    %v615 = vunpack.c.l.s4 1934713408
    %v616 = vunpack.c.0.s8 %v615
    %v617 = vperm.slane %v609, %v616
    %v618 = vrot.slane %v581, 4
    %v619 = vsel %vm424, %v618, %v569
    %v620 = vrot.slane %v569, 4
    %v621 = vsel %vm424, %v581, %v620
    %v623 = vunpack.c.l.s4 1934713408
    %v624 = vunpack.c.0.s8 %v623
    %v625 = vperm.slane %v619, %v624
    %v627 = vunpack.c.l.s4 1934713408
    %v628 = vunpack.c.0.s8 %v627
    %v629 = vperm.slane %v621, %v628
    %v630 = vrot.slane %v613, 4
    %v631 = vsel %vm424, %v630, %v589
    %v632 = vrot.slane %v589, 4
    %v633 = vsel %vm424, %v613, %v632
    %v634 = vrot.slane %v617, 4
    %v635 = vsel %vm424, %v634, %v593
    %v636 = vrot.slane %v593, 4
    %v637 = vsel %vm424, %v617, %v636
    %v638 = vrot.slane %v625, 4
    %v639 = vsel %vm424, %v638, %v601
    %v640 = vrot.slane %v601, 4
    %v641 = vsel %vm424, %v625, %v640
    %v642 = vrot.slane %v629, 4
    %v643 = vsel %vm424, %v642, %v605
    %646 = vrot.lane.b32.xlu0 %v523, 2
    %v647 = vpop.permute.xlu0 %646
    %648 = vrot.lane.b32.xlu0 %v633, 2
    %v649 = vpop.permute.xlu0 %648
    %654 = vrot.lane.b32.xlu0 %v525, 4
    %v655 = vpop.permute.xlu0 %654
    %656 = vrot.lane.b32.xlu0 %v635, 4
    %v657 = vpop.permute.xlu0 %656
    %662 = vrot.lane.b32.xlu0 %v527, 6
    %v663 = vpop.permute.xlu0 %662
    %664 = vrot.lane.b32.xlu0 %v637, 6
    %v665 = vpop.permute.xlu0 %664
    %670 = vrot.lane.b32.xlu0 %v529, 8
    %v671 = vpop.permute.xlu0 %670
    %672 = vrot.lane.b32.xlu0 %v639, 8
    %v673 = vpop.permute.xlu0 %672
    %678 = vrot.lane.b32.xlu0 %v531, 10
    %v679 = vpop.permute.xlu0 %678
    %680 = vrot.lane.b32.xlu0 %v641, 10
    %v681 = vpop.permute.xlu0 %680
    %686 = vrot.lane.b32.xlu0 %v533, 12
    %v687 = vpop.permute.xlu0 %686
    %688 = vrot.lane.b32.xlu0 %v643, 12
    %v689 = vpop.permute.xlu0 %688
    %vm692 = vcmask 15360
    %v693 = vsel %vm692, %v521, %v647
    %v694 = vsel %vm692, %v631, %v649
    %vm695 = vcmask 31744
    %v696 = vsel %vm695, %v693, %v655
    %v697 = vsel %vm695, %v694, %v657
    %vm698 = vcmask 48128
    %v699 = vsel %vm698, %v696, %v663
    %v700 = vsel %vm698, %v697, %v665
    %vm701 = vcmask 64512
    %v702 = vsel %vm701, %v699, %v671
    %v703 = vsel %vm701, %v700, %v673
    %vm704 = vcmask 80896
    %v705 = vsel %vm704, %v702, %v679
    %v706 = vsel %vm704, %v703, %v681
    %vm707 = vcmask 97280
    %v708 = vsel %vm707, %v705, %v687
    %v709 = vsel %vm707, %v706, %v689
    %v710 = vld [vmem:[%s2] sm:$0xff]
    %vm711 = vcmask 113664
    %v712 = vsel %vm711, %v708, 0.0
    %713 = vadd.xlane.f32.xlu0 %v712
    %v714 = vpop.xlane.xlu0 %713
    %v715 = vsel %vm711, %v709, 0.0
    %716 = vadd.xlane.f32.xlu0 %v715
    %v717 = vpop.xlane.xlu0 %716
    %v718 = vadd.f32 %v714, %v717
    %v719 = vmul.f32 %v708, %v708
    %v720 = vmul.f32 %v709, %v709
    %v721 = vsel %vm711, %v719, 0.0
    %722 = vadd.xlane.f32.xlu0 %v721
    %v723 = vpop.xlane.xlu0 %722
    %v724 = vsel %vm711, %v720, 0.0
    %725 = vadd.xlane.f32.xlu0 %v724
    %v726 = vpop.xlane.xlu0 %725
    %v727 = vadd.f32 %v723, %v726
    %v728 = vmul.f32 %v718, 0.035714287
    %v729 = vmul.f32 %v727, 0.035714287
    %v730 = vmul.f32 %v728, %v728
    %v731 = vsub.f32 %v729, %v730
    %v732 = vmax.f32 %v731, 0.0
    %v733 = vadd.f32 %v732, 1e-05
    %v734 = vrsqrt.pop %v733
    %v735 = vmul.f32 %v734, %v733
    %v736 = vmul.f32 %v735, %v734
    %v737 = vmul.f32 0.5, %v736
    %v738 = vsub.f32 1.5, %v737
    %v739 = vmul.f32 %v734, %v738
    %vm740 = vweird.f32 %v733
    %vm741 = vweird.f32 %v734
    %vm742 = vmor %vm740, %vm741
    %v743 = vsel %vm742, %v734, %v739
    %v744 = vmul.f32 %v710, %v743
    %746 = vset.pattern.permute.xlu0 1
    %747 = vperm.xlu0 %746, %v744
    %v748 = vpop.permute.xlu0 %747
    %v750 = vmul.f32 %v708, %v748
    %v751 = vmul.f32 %v709, %v748
    %v752 = vmul.f32 %v728, %v744
    %754 = vrot.lane.b32.xlu0 %v752, 1
    %v755 = vpop.permute.xlu0 %754
    %v757 = vsub.f32 %v710, %v755
    %759 = vset.pattern.permute.xlu0 2
    %760 = vperm.xlu0 %759, %v757
    %v761 = vpop.permute.xlu0 %760
    %v763 = vadd.f32 %v750, %v761
    %v764 = vadd.f32 %v751, %v761
    %v765 = vmax.f32 %v763, 0.0
    %v766 = vmax.f32 %v764, 0.0
    %v767 = vld [vmem:[%s3] sm:$0xff]
    %s768 = scalar_lea.vmem %s3, 16
    %v769 = vld [vmem:[%s768] sm:$0xff]
    %771 = vrot.lane.b32.xlu0 %v765, 127
    %v772 = vpop.permute.xlu0 %771
    %v775 = vsel %vm701, %v769, 0
    %777 = vmatpush.msra.mxu0 0.0
    %778 = vmatpush.msra.mxu0 0.0
    %779 = vmatpush.msra.mxu0 0.0
    %780 = vmatpush.msra.mxu0 0.0
    %781 = vmatpush.msra.mxu0 0.0
    %782 = vmatpush.msra.mxu0 0.0
    %783 = vmatpush.msra.mxu0 0.0
    %784 = vmatpush.msra.mxu0 0.0
    %785 = vmatpush.msra.mxu0 0.0
    %786 = vmatpush.msra.mxu0 0.0
    %787 = vmatpush.msra.mxu0 0.0
    %788 = vmatpush.msra.mxu0 0.0
    %789 = vmatpush.msra.mxu0 0.0
    %790 = vmatpush.msra.mxu0 0.0
    %791 = vmatpush.msra.mxu0 0.0
    %792 = vmatpush.msra.mxu0 %v772
    %793 = vmatmul.f32.gmra.mxu0 %v775
    %v794 = vpop.f32.mrf.mxu0
    %v795 = vadd.f32 0.0, %v794
    %796 = vdwg.mxu0
    %798 = vrot.lane.b32.xlu0 %v766, 127
    %v799 = vpop.permute.xlu0 %798
    %801 = vmatpush.msra.mxu0 0.0
    %802 = vmatpush.msra.mxu0 0.0
    %803 = vmatpush.msra.mxu0 0.0
    %804 = vmatpush.msra.mxu0 0.0
    %805 = vmatpush.msra.mxu0 0.0
    %806 = vmatpush.msra.mxu0 0.0
    %807 = vmatpush.msra.mxu0 0.0
    %808 = vmatpush.msra.mxu0 0.0
    %809 = vmatpush.msra.mxu0 0.0
    %810 = vmatpush.msra.mxu0 0.0
    %811 = vmatpush.msra.mxu0 0.0
    %812 = vmatpush.msra.mxu0 0.0
    %813 = vmatpush.msra.mxu0 0.0
    %814 = vmatpush.msra.mxu0 0.0
    %815 = vmatpush.msra.mxu0 0.0
    %816 = vmatpush.msra.mxu0 %v799
    %817 = vmatmul.f32.gmra.mxu0 %v775
    %v818 = vpop.f32.mrf.mxu0
    %v819 = vadd.f32 0.0, %v818
    %820 = vdwg.mxu0
    %v822 = vsel %vm701, %v767, 0
    %824 = vmatpush.msra.mxu0 0.0
    %825 = vmatpush.msra.mxu0 0.0
    %826 = vmatpush.msra.mxu0 0.0
    %827 = vmatpush.msra.mxu0 0.0
    %828 = vmatpush.msra.mxu0 0.0
    %829 = vmatpush.msra.mxu0 0.0
    %830 = vmatpush.msra.mxu0 0.0
    %831 = vmatpush.msra.mxu0 0.0
    %832 = vmatpush.msra.mxu0 0.0
    %833 = vmatpush.msra.mxu0 0.0
    %834 = vmatpush.msra.mxu0 0.0
    %835 = vmatpush.msra.mxu0 0.0
    %836 = vmatpush.msra.mxu0 0.0
    %837 = vmatpush.msra.mxu0 0.0
    %838 = vmatpush.msra.mxu0 0.0
    %839 = vmatpush.msra.mxu0 %v765
    %840 = vmatmul.f32.gmra.mxu0 %v822
    %v841 = vpop.f32.mrf.mxu0
    %v842 = vadd.f32 %v795, %v841
    %843 = vdwg.mxu0
    %844 = vmatpush.msra.mxu0 0.0
    %845 = vmatpush.msra.mxu0 0.0
    %846 = vmatpush.msra.mxu0 0.0
    %847 = vmatpush.msra.mxu0 0.0
    %848 = vmatpush.msra.mxu0 0.0
    %849 = vmatpush.msra.mxu0 0.0
    %850 = vmatpush.msra.mxu0 0.0
    %851 = vmatpush.msra.mxu0 0.0
    %852 = vmatpush.msra.mxu0 0.0
    %853 = vmatpush.msra.mxu0 0.0
    %854 = vmatpush.msra.mxu0 0.0
    %855 = vmatpush.msra.mxu0 0.0
    %856 = vmatpush.msra.mxu0 0.0
    %857 = vmatpush.msra.mxu0 0.0
    %858 = vmatpush.msra.mxu0 0.0
    %859 = vmatpush.msra.mxu0 %v766
    %860 = vmatmul.f32.gmra.mxu0 %v822
    %v861 = vpop.f32.mrf.mxu0
    %v862 = vadd.f32 %v819, %v861
    %863 = vdwg.mxu0
    %s864 = scalar_lea.vmem %s3, 8
    %v865 = vld [vmem:[%s864] sm:$0xff]
    %v867 = vsel %vm701, %v865, 0
    %869 = vmatpush.msra.mxu0 0.0
    %870 = vmatpush.msra.mxu0 0.0
    %871 = vmatpush.msra.mxu0 0.0
    %872 = vmatpush.msra.mxu0 0.0
    %873 = vmatpush.msra.mxu0 0.0
    %874 = vmatpush.msra.mxu0 0.0
    %875 = vmatpush.msra.mxu0 0.0
    %876 = vmatpush.msra.mxu0 0.0
    %877 = vmatpush.msra.mxu0 0.0
    %878 = vmatpush.msra.mxu0 0.0
    %879 = vmatpush.msra.mxu0 0.0
    %880 = vmatpush.msra.mxu0 0.0
    %881 = vmatpush.msra.mxu0 0.0
    %882 = vmatpush.msra.mxu0 0.0
    %883 = vmatpush.msra.mxu0 0.0
    %884 = vmatpush.msra.mxu0 %v772
    %885 = vmatmul.f32.gmra.mxu0 %v867
    %v886 = vpop.f32.mrf.mxu0
    %v887 = vadd.f32 0.0, %v886
    %888 = vdwg.mxu0
    %889 = vmatpush.msra.mxu0 0.0
    %890 = vmatpush.msra.mxu0 0.0
    %891 = vmatpush.msra.mxu0 0.0
    %892 = vmatpush.msra.mxu0 0.0
    %893 = vmatpush.msra.mxu0 0.0
    %894 = vmatpush.msra.mxu0 0.0
    %895 = vmatpush.msra.mxu0 0.0
    %896 = vmatpush.msra.mxu0 0.0
    %897 = vmatpush.msra.mxu0 0.0
    %898 = vmatpush.msra.mxu0 0.0
    %899 = vmatpush.msra.mxu0 0.0
    %900 = vmatpush.msra.mxu0 0.0
    %901 = vmatpush.msra.mxu0 0.0
    %902 = vmatpush.msra.mxu0 0.0
    %903 = vmatpush.msra.mxu0 0.0
    %904 = vmatpush.msra.mxu0 %v799
    %905 = vmatmul.f32.gmra.mxu0 %v867
    %v906 = vpop.f32.mrf.mxu0
    %v907 = vadd.f32 0.0, %v906
    %908 = vdwg.mxu0
    %v909 = vperm.slane %v842, 0
    %v910 = vlaneseq
    %v911 = vshrl.u32 %v910, 7
    %913 = vset.pattern.permute.xlu0 %v911
    %914 = vperm.xlu0 %913, %v909
    %v915 = vpop.permute.xlu0 %914
    %v916 = vlaneseq
    %v917 = vshrl.u32 %v916, 7
    %v918 = vadd.s32 %v917, 8
    %919 = vset.pattern.permute.xlu0 %v918
    %920 = vperm.xlu0 %919, %v909
    %v921 = vpop.permute.xlu0 %920
    %v922 = vperm.slane %v842, 1
    %v923 = vlaneseq
    %v924 = vshrl.u32 %v923, 7
    %926 = vset.pattern.permute.xlu0 %v924
    %927 = vperm.xlu0 %926, %v922
    %v928 = vpop.permute.xlu0 %927
    %v929 = vlaneseq
    %v930 = vshrl.u32 %v929, 7
    %v931 = vadd.s32 %v930, 8
    %932 = vset.pattern.permute.xlu0 %v931
    %933 = vperm.xlu0 %932, %v922
    %v934 = vpop.permute.xlu0 %933
    %v935 = vperm.slane %v842, 2
    %v936 = vlaneseq
    %v937 = vshrl.u32 %v936, 7
    %939 = vset.pattern.permute.xlu0 %v937
    %940 = vperm.xlu0 %939, %v935
    %v941 = vpop.permute.xlu0 %940
    %v942 = vlaneseq
    %v943 = vshrl.u32 %v942, 7
    %v944 = vadd.s32 %v943, 8
    %945 = vset.pattern.permute.xlu0 %v944
    %946 = vperm.xlu0 %945, %v935
    %v947 = vpop.permute.xlu0 %946
    %v948 = vperm.slane %v842, 3
    %v949 = vlaneseq
    %v950 = vshrl.u32 %v949, 7
    %952 = vset.pattern.permute.xlu0 %v950
    %953 = vperm.xlu0 %952, %v948
    %v954 = vpop.permute.xlu0 %953
    %v955 = vlaneseq
    %v956 = vshrl.u32 %v955, 7
    %v957 = vadd.s32 %v956, 8
    %958 = vset.pattern.permute.xlu0 %v957
    %959 = vperm.xlu0 %958, %v948
    %v960 = vpop.permute.xlu0 %959
    %v961 = vperm.slane %v842, 4
    %v962 = vlaneseq
    %v963 = vshrl.u32 %v962, 7
    %965 = vset.pattern.permute.xlu0 %v963
    %966 = vperm.xlu0 %965, %v961
    %v967 = vpop.permute.xlu0 %966
    %v968 = vlaneseq
    %v969 = vshrl.u32 %v968, 7
    %v970 = vadd.s32 %v969, 8
    %971 = vset.pattern.permute.xlu0 %v970
    %972 = vperm.xlu0 %971, %v961
    %v973 = vpop.permute.xlu0 %972
    %v974 = vperm.slane %v842, 5
    %v975 = vlaneseq
    %v976 = vshrl.u32 %v975, 7
    %978 = vset.pattern.permute.xlu0 %v976
    %979 = vperm.xlu0 %978, %v974
    %v980 = vpop.permute.xlu0 %979
    %v981 = vlaneseq
    %v982 = vshrl.u32 %v981, 7
    %v983 = vadd.s32 %v982, 8
    %984 = vset.pattern.permute.xlu0 %v983
    %985 = vperm.xlu0 %984, %v974
    %v986 = vpop.permute.xlu0 %985
    %v987 = vperm.slane %v842, 6
    %v988 = vlaneseq
    %v989 = vshrl.u32 %v988, 7
    %991 = vset.pattern.permute.xlu0 %v989
    %992 = vperm.xlu0 %991, %v987
    %v993 = vpop.permute.xlu0 %992
    %v994 = vlaneseq
    %v995 = vshrl.u32 %v994, 7
    %v996 = vadd.s32 %v995, 8
    %997 = vset.pattern.permute.xlu0 %v996
    %998 = vperm.xlu0 %997, %v987
    %v999 = vpop.permute.xlu0 %998
    %v1000 = vperm.slane %v842, 7
    %v1001 = vlaneseq
    %v1002 = vshrl.u32 %v1001, 7
    %1004 = vset.pattern.permute.xlu0 %v1002
    %1005 = vperm.xlu0 %1004, %v1000
    %v1006 = vpop.permute.xlu0 %1005
    %v1007 = vlaneseq
    %v1008 = vshrl.u32 %v1007, 7
    %v1009 = vadd.s32 %v1008, 8
    %1010 = vset.pattern.permute.xlu0 %v1009
    %1011 = vperm.xlu0 %1010, %v1000
    %v1012 = vpop.permute.xlu0 %1011
    %v1013 = vperm.slane %v862, 0
    %v1014 = vlaneseq
    %v1015 = vshrl.u32 %v1014, 7
    %1017 = vset.pattern.permute.xlu0 %v1015
    %1018 = vperm.xlu0 %1017, %v1013
    %v1019 = vpop.permute.xlu0 %1018
    %v1020 = vlaneseq
    %v1021 = vshrl.u32 %v1020, 7
    %v1022 = vadd.s32 %v1021, 8
    %1023 = vset.pattern.permute.xlu0 %v1022
    %1024 = vperm.xlu0 %1023, %v1013
    %v1025 = vpop.permute.xlu0 %1024
    %v1026 = vperm.slane %v862, 1
    %v1027 = vlaneseq
    %v1028 = vshrl.u32 %v1027, 7
    %1030 = vset.pattern.permute.xlu0 %v1028
    %1031 = vperm.xlu0 %1030, %v1026
    %v1032 = vpop.permute.xlu0 %1031
    %v1033 = vlaneseq
    %v1034 = vshrl.u32 %v1033, 7
    %v1035 = vadd.s32 %v1034, 8
    %1036 = vset.pattern.permute.xlu0 %v1035
    %1037 = vperm.xlu0 %1036, %v1026
    %v1038 = vpop.permute.xlu0 %1037
    %v1039 = vperm.slane %v862, 2
    %v1040 = vlaneseq
    %v1041 = vshrl.u32 %v1040, 7
    %1043 = vset.pattern.permute.xlu0 %v1041
    %1044 = vperm.xlu0 %1043, %v1039
    %v1045 = vpop.permute.xlu0 %1044
    %v1046 = vlaneseq
    %v1047 = vshrl.u32 %v1046, 7
    %v1048 = vadd.s32 %v1047, 8
    %1049 = vset.pattern.permute.xlu0 %v1048
    %1050 = vperm.xlu0 %1049, %v1039
    %v1051 = vpop.permute.xlu0 %1050
    %v1052 = vperm.slane %v862, 3
    %v1053 = vlaneseq
    %v1054 = vshrl.u32 %v1053, 7
    %1056 = vset.pattern.permute.xlu0 %v1054
    %1057 = vperm.xlu0 %1056, %v1052
    %v1058 = vpop.permute.xlu0 %1057
    %v1059 = vlaneseq
    %v1060 = vshrl.u32 %v1059, 7
    %v1061 = vadd.s32 %v1060, 8
    %1062 = vset.pattern.permute.xlu0 %v1061
    %1063 = vperm.xlu0 %1062, %v1052
    %v1064 = vpop.permute.xlu0 %1063
    %v1065 = vperm.slane %v862, 4
    %v1066 = vlaneseq
    %v1067 = vshrl.u32 %v1066, 7
    %1069 = vset.pattern.permute.xlu0 %v1067
    %1070 = vperm.xlu0 %1069, %v1065
    %v1071 = vpop.permute.xlu0 %1070
    %v1072 = vlaneseq
    %v1073 = vshrl.u32 %v1072, 7
    %v1074 = vadd.s32 %v1073, 8
    %1075 = vset.pattern.permute.xlu0 %v1074
    %1076 = vperm.xlu0 %1075, %v1065
    %v1077 = vpop.permute.xlu0 %1076
    %v1078 = vperm.slane %v862, 5
    %v1079 = vlaneseq
    %v1080 = vshrl.u32 %v1079, 7
    %1082 = vset.pattern.permute.xlu0 %v1080
    %1083 = vperm.xlu0 %1082, %v1078
    %v1084 = vpop.permute.xlu0 %1083
    %v1085 = vlaneseq
    %v1086 = vshrl.u32 %v1085, 7
    %v1087 = vadd.s32 %v1086, 8
    %1088 = vset.pattern.permute.xlu0 %v1087
    %1089 = vperm.xlu0 %1088, %v1078
    %v1090 = vpop.permute.xlu0 %1089
    %v1091 = vperm.slane %v862, 6
    %v1092 = vlaneseq
    %v1093 = vshrl.u32 %v1092, 7
    %1095 = vset.pattern.permute.xlu0 %v1093
    %1096 = vperm.xlu0 %1095, %v1091
    %v1097 = vpop.permute.xlu0 %1096
    %v1098 = vlaneseq
    %v1099 = vshrl.u32 %v1098, 7
    %v1100 = vadd.s32 %v1099, 8
    %1101 = vset.pattern.permute.xlu0 %v1100
    %1102 = vperm.xlu0 %1101, %v1091
    %v1103 = vpop.permute.xlu0 %1102
    %v1104 = vperm.slane %v862, 7
    %v1105 = vlaneseq
    %v1106 = vshrl.u32 %v1105, 7
    %1108 = vset.pattern.permute.xlu0 %v1106
    %1109 = vperm.xlu0 %1108, %v1104
    %v1110 = vpop.permute.xlu0 %1109
    %v1111 = vlaneseq
    %v1112 = vshrl.u32 %v1111, 7
    %v1113 = vadd.s32 %v1112, 8
    %1114 = vset.pattern.permute.xlu0 %v1113
    %1115 = vperm.xlu0 %1114, %v1104
    %v1116 = vpop.permute.xlu0 %1115
    %v1117 = vperm.slane %v887, 0
    %v1118 = vlaneseq
    %v1119 = vshrl.u32 %v1118, 7
    %1121 = vset.pattern.permute.xlu0 %v1119
    %1122 = vperm.xlu0 %1121, %v1117
    %v1123 = vpop.permute.xlu0 %1122
    %v1124 = vlaneseq
    %v1125 = vshrl.u32 %v1124, 7
    %v1126 = vadd.s32 %v1125, 8
    %1127 = vset.pattern.permute.xlu0 %v1126
    %1128 = vperm.xlu0 %1127, %v1117
    %v1129 = vpop.permute.xlu0 %1128
    %v1130 = vperm.slane %v887, 1
    %v1131 = vlaneseq
    %v1132 = vshrl.u32 %v1131, 7
    %1134 = vset.pattern.permute.xlu0 %v1132
    %1135 = vperm.xlu0 %1134, %v1130
    %v1136 = vpop.permute.xlu0 %1135
    %v1137 = vlaneseq
    %v1138 = vshrl.u32 %v1137, 7
    %v1139 = vadd.s32 %v1138, 8
    %1140 = vset.pattern.permute.xlu0 %v1139
    %1141 = vperm.xlu0 %1140, %v1130
    %v1142 = vpop.permute.xlu0 %1141
    %v1143 = vperm.slane %v887, 2
    %v1144 = vlaneseq
    %v1145 = vshrl.u32 %v1144, 7
    %1147 = vset.pattern.permute.xlu0 %v1145
    %1148 = vperm.xlu0 %1147, %v1143
    %v1149 = vpop.permute.xlu0 %1148
    %v1150 = vlaneseq
    %v1151 = vshrl.u32 %v1150, 7
    %v1152 = vadd.s32 %v1151, 8
    %1153 = vset.pattern.permute.xlu0 %v1152
    %1154 = vperm.xlu0 %1153, %v1143
    %v1155 = vpop.permute.xlu0 %1154
    %v1156 = vperm.slane %v887, 3
    %v1157 = vlaneseq
    %v1158 = vshrl.u32 %v1157, 7
    %1160 = vset.pattern.permute.xlu0 %v1158
    %1161 = vperm.xlu0 %1160, %v1156
    %v1162 = vpop.permute.xlu0 %1161
    %v1163 = vlaneseq
    %v1164 = vshrl.u32 %v1163, 7
    %v1165 = vadd.s32 %v1164, 8
    %1166 = vset.pattern.permute.xlu0 %v1165
    %1167 = vperm.xlu0 %1166, %v1156
    %v1168 = vpop.permute.xlu0 %1167
    %v1169 = vperm.slane %v887, 4
    %v1170 = vlaneseq
    %v1171 = vshrl.u32 %v1170, 7
    %1173 = vset.pattern.permute.xlu0 %v1171
    %1174 = vperm.xlu0 %1173, %v1169
    %v1175 = vpop.permute.xlu0 %1174
    %v1176 = vlaneseq
    %v1177 = vshrl.u32 %v1176, 7
    %v1178 = vadd.s32 %v1177, 8
    %1179 = vset.pattern.permute.xlu0 %v1178
    %1180 = vperm.xlu0 %1179, %v1169
    %v1181 = vpop.permute.xlu0 %1180
    %v1182 = vperm.slane %v887, 5
    %v1183 = vlaneseq
    %v1184 = vshrl.u32 %v1183, 7
    %1186 = vset.pattern.permute.xlu0 %v1184
    %1187 = vperm.xlu0 %1186, %v1182
    %v1188 = vpop.permute.xlu0 %1187
    %v1189 = vlaneseq
    %v1190 = vshrl.u32 %v1189, 7
    %v1191 = vadd.s32 %v1190, 8
    %1192 = vset.pattern.permute.xlu0 %v1191
    %1193 = vperm.xlu0 %1192, %v1182
    %v1194 = vpop.permute.xlu0 %1193
    %v1195 = vperm.slane %v887, 6
    %v1196 = vlaneseq
    %v1197 = vshrl.u32 %v1196, 7
    %1199 = vset.pattern.permute.xlu0 %v1197
    %1200 = vperm.xlu0 %1199, %v1195
    %v1201 = vpop.permute.xlu0 %1200
    %v1202 = vlaneseq
    %v1203 = vshrl.u32 %v1202, 7
    %v1204 = vadd.s32 %v1203, 8
    %1205 = vset.pattern.permute.xlu0 %v1204
    %1206 = vperm.xlu0 %1205, %v1195
    %v1207 = vpop.permute.xlu0 %1206
    %v1208 = vperm.slane %v887, 7
    %v1209 = vlaneseq
    %v1210 = vshrl.u32 %v1209, 7
    %1212 = vset.pattern.permute.xlu0 %v1210
    %1213 = vperm.xlu0 %1212, %v1208
    %v1214 = vpop.permute.xlu0 %1213
    %v1215 = vlaneseq
    %v1216 = vshrl.u32 %v1215, 7
    %v1217 = vadd.s32 %v1216, 8
    %1218 = vset.pattern.permute.xlu0 %v1217
    %1219 = vperm.xlu0 %1218, %v1208
    %v1220 = vpop.permute.xlu0 %1219
    %v1221 = vperm.slane %v907, 0
    %v1222 = vlaneseq
    %v1223 = vshrl.u32 %v1222, 7
    %1225 = vset.pattern.permute.xlu0 %v1223
    %1226 = vperm.xlu0 %1225, %v1221
    %v1227 = vpop.permute.xlu0 %1226
    %v1228 = vlaneseq
    %v1229 = vshrl.u32 %v1228, 7
    %v1230 = vadd.s32 %v1229, 8
    %1231 = vset.pattern.permute.xlu0 %v1230
    %1232 = vperm.xlu0 %1231, %v1221
    %v1233 = vpop.permute.xlu0 %1232
    %v1234 = vperm.slane %v907, 1
    %v1235 = vlaneseq
    %v1236 = vshrl.u32 %v1235, 7
    %1238 = vset.pattern.permute.xlu0 %v1236
    %1239 = vperm.xlu0 %1238, %v1234
    %v1240 = vpop.permute.xlu0 %1239
    %v1241 = vlaneseq
    %v1242 = vshrl.u32 %v1241, 7
    %v1243 = vadd.s32 %v1242, 8
    %1244 = vset.pattern.permute.xlu0 %v1243
    %1245 = vperm.xlu0 %1244, %v1234
    %v1246 = vpop.permute.xlu0 %1245
    %v1247 = vperm.slane %v907, 2
    %v1248 = vlaneseq
    %v1249 = vshrl.u32 %v1248, 7
    %1251 = vset.pattern.permute.xlu0 %v1249
    %1252 = vperm.xlu0 %1251, %v1247
    %v1253 = vpop.permute.xlu0 %1252
    %v1254 = vlaneseq
    %v1255 = vshrl.u32 %v1254, 7
    %v1256 = vadd.s32 %v1255, 8
    %1257 = vset.pattern.permute.xlu0 %v1256
    %1258 = vperm.xlu0 %1257, %v1247
    %v1259 = vpop.permute.xlu0 %1258
    %v1260 = vperm.slane %v907, 3
    %v1261 = vlaneseq
    %v1262 = vshrl.u32 %v1261, 7
    %1264 = vset.pattern.permute.xlu0 %v1262
    %1265 = vperm.xlu0 %1264, %v1260
    %v1266 = vpop.permute.xlu0 %1265
    %v1267 = vlaneseq
    %v1268 = vshrl.u32 %v1267, 7
    %v1269 = vadd.s32 %v1268, 8
    %1270 = vset.pattern.permute.xlu0 %v1269
    %1271 = vperm.xlu0 %1270, %v1260
    %v1272 = vpop.permute.xlu0 %1271
    %v1273 = vperm.slane %v907, 4
    %v1274 = vlaneseq
    %v1275 = vshrl.u32 %v1274, 7
    %1277 = vset.pattern.permute.xlu0 %v1275
    %1278 = vperm.xlu0 %1277, %v1273
    %v1279 = vpop.permute.xlu0 %1278
    %v1280 = vlaneseq
    %v1281 = vshrl.u32 %v1280, 7
    %v1282 = vadd.s32 %v1281, 8
    %1283 = vset.pattern.permute.xlu0 %v1282
    %1284 = vperm.xlu0 %1283, %v1273
    %v1285 = vpop.permute.xlu0 %1284
    %v1286 = vperm.slane %v907, 5
    %v1287 = vlaneseq
    %v1288 = vshrl.u32 %v1287, 7
    %1290 = vset.pattern.permute.xlu0 %v1288
    %1291 = vperm.xlu0 %1290, %v1286
    %v1292 = vpop.permute.xlu0 %1291
    %v1293 = vlaneseq
    %v1294 = vshrl.u32 %v1293, 7
    %v1295 = vadd.s32 %v1294, 8
    %1296 = vset.pattern.permute.xlu0 %v1295
    %1297 = vperm.xlu0 %1296, %v1286
    %v1298 = vpop.permute.xlu0 %1297
    %v1299 = vperm.slane %v907, 6
    %v1300 = vlaneseq
    %v1301 = vshrl.u32 %v1300, 7
    %1303 = vset.pattern.permute.xlu0 %v1301
    %1304 = vperm.xlu0 %1303, %v1299
    %v1305 = vpop.permute.xlu0 %1304
    %v1306 = vlaneseq
    %v1307 = vshrl.u32 %v1306, 7
    %v1308 = vadd.s32 %v1307, 8
    %1309 = vset.pattern.permute.xlu0 %v1308
    %1310 = vperm.xlu0 %1309, %v1299
    %v1311 = vpop.permute.xlu0 %1310
    %v1312 = vperm.slane %v907, 7
    %v1313 = vlaneseq
    %v1314 = vshrl.u32 %v1313, 7
    %1316 = vset.pattern.permute.xlu0 %v1314
    %1317 = vperm.xlu0 %1316, %v1312
    %v1318 = vpop.permute.xlu0 %1317
    %v1319 = vlaneseq
    %v1320 = vshrl.u32 %v1319, 7
    %v1321 = vadd.s32 %v1320, 8
    %1322 = vset.pattern.permute.xlu0 %v1321
    %1323 = vperm.xlu0 %1322, %v1312
    %v1324 = vpop.permute.xlu0 %1323
    %v1325 = vsel %vm406, %v915, %v1123
    %v1326 = vsel %vm406, %v921, %v1129
    %v1327 = vsel %vm406, %v928, %v1136
    %v1328 = vsel %vm406, %v934, %v1142
    %v1329 = vsel %vm406, %v941, %v1149
    %v1330 = vsel %vm406, %v947, %v1155
    %v1331 = vsel %vm406, %v954, %v1162
    %v1332 = vsel %vm406, %v960, %v1168
    %v1333 = vsel %vm406, %v967, %v1175
    %v1334 = vsel %vm406, %v973, %v1181
    %v1335 = vsel %vm406, %v980, %v1188
    %v1336 = vsel %vm406, %v986, %v1194
    %v1337 = vsel %vm406, %v993, %v1201
    %v1338 = vsel %vm406, %v999, %v1207
    %v1339 = vsel %vm406, %v1006, %v1214
    %v1340 = vsel %vm406, %v1012, %v1220
    %v1341 = vsel %vm406, %v1019, %v1227
    %v1342 = vsel %vm406, %v1025, %v1233
    %v1343 = vsel %vm406, %v1032, %v1240
    %v1344 = vsel %vm406, %v1038, %v1246
    %v1345 = vsel %vm406, %v1045, %v1253
    %v1346 = vsel %vm406, %v1051, %v1259
    %v1347 = vsel %vm406, %v1058, %v1266
    %v1348 = vsel %vm406, %v1064, %v1272
    %v1349 = vsel %vm406, %v1071, %v1279
    %v1350 = vsel %vm406, %v1077, %v1285
    %v1351 = vsel %vm406, %v1084, %v1292
    %v1352 = vsel %vm406, %v1090, %v1298
    %v1353 = vsel %vm406, %v1097, %v1305
    %v1354 = vsel %vm406, %v1103, %v1311
    %v1355 = vsel %vm406, %v1110, %v1318
    %v1356 = vsel %vm406, %v1116, %v1324
    %v1357 = vrot.slane %v1329, 4
    %v1358 = vsel %vm424, %v1357, %v1325
    %v1359 = vrot.slane %v1325, 4
    %v1360 = vsel %vm424, %v1329, %v1359
    %v1362 = vunpack.c.l.s4 1983009808
    %v1363 = vunpack.c.0.s8 %v1362
    %v1364 = vperm.slane %v1358, %v1363
    %v1366 = vunpack.c.l.s4 1983009808
    %v1367 = vunpack.c.0.s8 %v1366
    %v1368 = vperm.slane %v1360, %v1367
    %v1369 = vrot.slane %v1331, 4
    %v1370 = vsel %vm424, %v1369, %v1327
    %v1371 = vrot.slane %v1327, 4
    %v1372 = vsel %vm424, %v1331, %v1371
    %v1374 = vunpack.c.l.s4 1983009808
    %v1375 = vunpack.c.0.s8 %v1374
    %v1376 = vperm.slane %v1370, %v1375
    %v1378 = vunpack.c.l.s4 1983009808
    %v1379 = vunpack.c.0.s8 %v1378
    %v1380 = vperm.slane %v1372, %v1379
    %v1381 = vrot.slane %v1337, 4
    %v1382 = vsel %vm424, %v1381, %v1333
    %v1383 = vrot.slane %v1333, 4
    %v1384 = vsel %vm424, %v1337, %v1383
    %v1386 = vunpack.c.l.s4 1983009808
    %v1387 = vunpack.c.0.s8 %v1386
    %v1388 = vperm.slane %v1382, %v1387
    %v1390 = vunpack.c.l.s4 1983009808
    %v1391 = vunpack.c.0.s8 %v1390
    %v1392 = vperm.slane %v1384, %v1391
    %v1393 = vrot.slane %v1339, 4
    %v1394 = vsel %vm424, %v1393, %v1335
    %v1395 = vrot.slane %v1335, 4
    %v1396 = vsel %vm424, %v1339, %v1395
    %v1398 = vunpack.c.l.s4 1983009808
    %v1399 = vunpack.c.0.s8 %v1398
    %v1400 = vperm.slane %v1394, %v1399
    %v1402 = vunpack.c.l.s4 1983009808
    %v1403 = vunpack.c.0.s8 %v1402
    %v1404 = vperm.slane %v1396, %v1403
    %v1405 = vrot.slane %v1376, 4
    %v1406 = vsel %vm424, %v1405, %v1364
    %v1407 = vrot.slane %v1364, 4
    %v1408 = vsel %vm424, %v1376, %v1407
    %v1410 = vunpack.c.l.s4 1934713408
    %v1411 = vunpack.c.0.s8 %v1410
    %v1412 = vperm.slane %v1406, %v1411
    %v1414 = vunpack.c.l.s4 1934713408
    %v1415 = vunpack.c.0.s8 %v1414
    %v1416 = vperm.slane %v1408, %v1415
    %v1417 = vrot.slane %v1380, 4
    %v1418 = vsel %vm424, %v1417, %v1368
    %v1419 = vrot.slane %v1368, 4
    %v1420 = vsel %vm424, %v1380, %v1419
    %v1422 = vunpack.c.l.s4 1934713408
    %v1423 = vunpack.c.0.s8 %v1422
    %v1424 = vperm.slane %v1418, %v1423
    %v1426 = vunpack.c.l.s4 1934713408
    %v1427 = vunpack.c.0.s8 %v1426
    %v1428 = vperm.slane %v1420, %v1427
    %v1429 = vrot.slane %v1400, 4
    %v1430 = vsel %vm424, %v1429, %v1388
    %v1431 = vrot.slane %v1388, 4
    %v1432 = vsel %vm424, %v1400, %v1431
    %v1434 = vunpack.c.l.s4 1934713408
    %v1435 = vunpack.c.0.s8 %v1434
    %v1436 = vperm.slane %v1430, %v1435
    %v1438 = vunpack.c.l.s4 1934713408
    %v1439 = vunpack.c.0.s8 %v1438
    %v1440 = vperm.slane %v1432, %v1439
    %v1441 = vrot.slane %v1404, 4
    %v1442 = vsel %vm424, %v1441, %v1392
    %v1443 = vrot.slane %v1392, 4
    %v1444 = vsel %vm424, %v1404, %v1443
    %v1446 = vunpack.c.l.s4 1934713408
    %v1447 = vunpack.c.0.s8 %v1446
    %v1448 = vperm.slane %v1442, %v1447
    %v1450 = vunpack.c.l.s4 1934713408
    %v1451 = vunpack.c.0.s8 %v1450
    %v1452 = vperm.slane %v1444, %v1451
    %v1453 = vrot.slane %v1436, 4
    %v1454 = vsel %vm424, %v1453, %v1412
    %v1455 = vrot.slane %v1412, 4
    %v1456 = vsel %vm424, %v1436, %v1455
    %v1457 = vrot.slane %v1440, 4
    %v1458 = vsel %vm424, %v1457, %v1416
    %v1459 = vrot.slane %v1416, 4
    %v1460 = vsel %vm424, %v1440, %v1459
    %v1461 = vrot.slane %v1448, 4
    %v1462 = vsel %vm424, %v1461, %v1424
    %v1463 = vrot.slane %v1424, 4
    %v1464 = vsel %vm424, %v1448, %v1463
    %v1465 = vrot.slane %v1452, 4
    %v1466 = vsel %vm424, %v1465, %v1428
    %v1467 = vrot.slane %v1428, 4
    %v1468 = vsel %vm424, %v1452, %v1467
    %v1469 = vrot.slane %v1330, 4
    %v1470 = vsel %vm424, %v1469, %v1326
    %v1471 = vrot.slane %v1326, 4
    %v1472 = vsel %vm424, %v1330, %v1471
    %v1474 = vunpack.c.l.s4 1983009808
    %v1475 = vunpack.c.0.s8 %v1474
    %v1476 = vperm.slane %v1470, %v1475
    %v1478 = vunpack.c.l.s4 1983009808
    %v1479 = vunpack.c.0.s8 %v1478
    %v1480 = vperm.slane %v1472, %v1479
    %v1481 = vrot.slane %v1332, 4
    %v1482 = vsel %vm424, %v1481, %v1328
    %v1483 = vrot.slane %v1328, 4
    %v1484 = vsel %vm424, %v1332, %v1483
    %v1486 = vunpack.c.l.s4 1983009808
    %v1487 = vunpack.c.0.s8 %v1486
    %v1488 = vperm.slane %v1482, %v1487
    %v1490 = vunpack.c.l.s4 1983009808
    %v1491 = vunpack.c.0.s8 %v1490
    %v1492 = vperm.slane %v1484, %v1491
    %v1493 = vrot.slane %v1338, 4
    %v1494 = vsel %vm424, %v1493, %v1334
    %v1495 = vrot.slane %v1334, 4
    %v1496 = vsel %vm424, %v1338, %v1495
    %v1498 = vunpack.c.l.s4 1983009808
    %v1499 = vunpack.c.0.s8 %v1498
    %v1500 = vperm.slane %v1494, %v1499
    %v1502 = vunpack.c.l.s4 1983009808
    %v1503 = vunpack.c.0.s8 %v1502
    %v1504 = vperm.slane %v1496, %v1503
    %v1505 = vrot.slane %v1340, 4
    %v1506 = vsel %vm424, %v1505, %v1336
    %v1507 = vrot.slane %v1336, 4
    %v1508 = vsel %vm424, %v1340, %v1507
    %v1510 = vunpack.c.l.s4 1983009808
    %v1511 = vunpack.c.0.s8 %v1510
    %v1512 = vperm.slane %v1506, %v1511
    %v1514 = vunpack.c.l.s4 1983009808
    %v1515 = vunpack.c.0.s8 %v1514
    %v1516 = vperm.slane %v1508, %v1515
    %v1517 = vrot.slane %v1488, 4
    %v1518 = vsel %vm424, %v1517, %v1476
    %v1519 = vrot.slane %v1476, 4
    %v1520 = vsel %vm424, %v1488, %v1519
    %v1522 = vunpack.c.l.s4 1934713408
    %v1523 = vunpack.c.0.s8 %v1522
    %v1524 = vperm.slane %v1518, %v1523
    %v1526 = vunpack.c.l.s4 1934713408
    %v1527 = vunpack.c.0.s8 %v1526
    %v1528 = vperm.slane %v1520, %v1527
    %v1529 = vrot.slane %v1492, 4
    %v1530 = vsel %vm424, %v1529, %v1480
    %v1532 = vunpack.c.l.s4 1934713408
    %v1533 = vunpack.c.0.s8 %v1532
    %v1534 = vperm.slane %v1530, %v1533
    %v1535 = vrot.slane %v1512, 4
    %v1536 = vsel %vm424, %v1535, %v1500
    %v1537 = vrot.slane %v1500, 4
    %v1538 = vsel %vm424, %v1512, %v1537
    %v1540 = vunpack.c.l.s4 1934713408
    %v1541 = vunpack.c.0.s8 %v1540
    %v1542 = vperm.slane %v1536, %v1541
    %v1544 = vunpack.c.l.s4 1934713408
    %v1545 = vunpack.c.0.s8 %v1544
    %v1546 = vperm.slane %v1538, %v1545
    %v1547 = vrot.slane %v1516, 4
    %v1548 = vsel %vm424, %v1547, %v1504
    %v1550 = vunpack.c.l.s4 1934713408
    %v1551 = vunpack.c.0.s8 %v1550
    %v1552 = vperm.slane %v1548, %v1551
    %v1553 = vrot.slane %v1542, 4
    %v1554 = vsel %vm424, %v1553, %v1524
    %v1555 = vrot.slane %v1524, 4
    %v1556 = vsel %vm424, %v1542, %v1555
    %v1557 = vrot.slane %v1546, 4
    %v1558 = vsel %vm424, %v1557, %v1528
    %v1559 = vrot.slane %v1528, 4
    %v1560 = vsel %vm424, %v1546, %v1559
    %v1561 = vrot.slane %v1552, 4
    %v1562 = vsel %vm424, %v1561, %v1534
    %v1563 = vrot.slane %v1345, 4
    %v1564 = vsel %vm424, %v1563, %v1341
    %v1565 = vrot.slane %v1341, 4
    %v1566 = vsel %vm424, %v1345, %v1565
    %v1568 = vunpack.c.l.s4 1983009808
    %v1569 = vunpack.c.0.s8 %v1568
    %v1570 = vperm.slane %v1564, %v1569
    %v1572 = vunpack.c.l.s4 1983009808
    %v1573 = vunpack.c.0.s8 %v1572
    %v1574 = vperm.slane %v1566, %v1573
    %v1575 = vrot.slane %v1347, 4
    %v1576 = vsel %vm424, %v1575, %v1343
    %v1577 = vrot.slane %v1343, 4
    %v1578 = vsel %vm424, %v1347, %v1577
    %v1580 = vunpack.c.l.s4 1983009808
    %v1581 = vunpack.c.0.s8 %v1580
    %v1582 = vperm.slane %v1576, %v1581
    %v1584 = vunpack.c.l.s4 1983009808
    %v1585 = vunpack.c.0.s8 %v1584
    %v1586 = vperm.slane %v1578, %v1585
    %v1587 = vrot.slane %v1353, 4
    %v1588 = vsel %vm424, %v1587, %v1349
    %v1589 = vrot.slane %v1349, 4
    %v1590 = vsel %vm424, %v1353, %v1589
    %v1592 = vunpack.c.l.s4 1983009808
    %v1593 = vunpack.c.0.s8 %v1592
    %v1594 = vperm.slane %v1588, %v1593
    %v1596 = vunpack.c.l.s4 1983009808
    %v1597 = vunpack.c.0.s8 %v1596
    %v1598 = vperm.slane %v1590, %v1597
    %v1599 = vrot.slane %v1355, 4
    %v1600 = vsel %vm424, %v1599, %v1351
    %v1601 = vrot.slane %v1351, 4
    %v1602 = vsel %vm424, %v1355, %v1601
    %v1604 = vunpack.c.l.s4 1983009808
    %v1605 = vunpack.c.0.s8 %v1604
    %v1606 = vperm.slane %v1600, %v1605
    %v1608 = vunpack.c.l.s4 1983009808
    %v1609 = vunpack.c.0.s8 %v1608
    %v1610 = vperm.slane %v1602, %v1609
    %v1611 = vrot.slane %v1582, 4
    %v1612 = vsel %vm424, %v1611, %v1570
    %v1613 = vrot.slane %v1570, 4
    %v1614 = vsel %vm424, %v1582, %v1613
    %v1616 = vunpack.c.l.s4 1934713408
    %v1617 = vunpack.c.0.s8 %v1616
    %v1618 = vperm.slane %v1612, %v1617
    %v1620 = vunpack.c.l.s4 1934713408
    %v1621 = vunpack.c.0.s8 %v1620
    %v1622 = vperm.slane %v1614, %v1621
    %v1623 = vrot.slane %v1586, 4
    %v1624 = vsel %vm424, %v1623, %v1574
    %v1625 = vrot.slane %v1574, 4
    %v1626 = vsel %vm424, %v1586, %v1625
    %v1628 = vunpack.c.l.s4 1934713408
    %v1629 = vunpack.c.0.s8 %v1628
    %v1630 = vperm.slane %v1624, %v1629
    %v1632 = vunpack.c.l.s4 1934713408
    %v1633 = vunpack.c.0.s8 %v1632
    %v1634 = vperm.slane %v1626, %v1633
    %v1635 = vrot.slane %v1606, 4
    %v1636 = vsel %vm424, %v1635, %v1594
    %v1637 = vrot.slane %v1594, 4
    %v1638 = vsel %vm424, %v1606, %v1637
    %v1640 = vunpack.c.l.s4 1934713408
    %v1641 = vunpack.c.0.s8 %v1640
    %v1642 = vperm.slane %v1636, %v1641
    %v1644 = vunpack.c.l.s4 1934713408
    %v1645 = vunpack.c.0.s8 %v1644
    %v1646 = vperm.slane %v1638, %v1645
    %v1647 = vrot.slane %v1610, 4
    %v1648 = vsel %vm424, %v1647, %v1598
    %v1649 = vrot.slane %v1598, 4
    %v1650 = vsel %vm424, %v1610, %v1649
    %v1652 = vunpack.c.l.s4 1934713408
    %v1653 = vunpack.c.0.s8 %v1652
    %v1654 = vperm.slane %v1648, %v1653
    %v1656 = vunpack.c.l.s4 1934713408
    %v1657 = vunpack.c.0.s8 %v1656
    %v1658 = vperm.slane %v1650, %v1657
    %v1659 = vrot.slane %v1642, 4
    %v1660 = vsel %vm424, %v1659, %v1618
    %v1661 = vrot.slane %v1618, 4
    %v1662 = vsel %vm424, %v1642, %v1661
    %v1663 = vrot.slane %v1646, 4
    %v1664 = vsel %vm424, %v1663, %v1622
    %v1665 = vrot.slane %v1622, 4
    %v1666 = vsel %vm424, %v1646, %v1665
    %v1667 = vrot.slane %v1654, 4
    %v1668 = vsel %vm424, %v1667, %v1630
    %v1669 = vrot.slane %v1630, 4
    %v1670 = vsel %vm424, %v1654, %v1669
    %v1671 = vrot.slane %v1658, 4
    %v1672 = vsel %vm424, %v1671, %v1634
    %v1673 = vrot.slane %v1634, 4
    %v1674 = vsel %vm424, %v1658, %v1673
    %v1675 = vrot.slane %v1346, 4
    %v1676 = vsel %vm424, %v1675, %v1342
    %v1677 = vrot.slane %v1342, 4
    %v1678 = vsel %vm424, %v1346, %v1677
    %v1680 = vunpack.c.l.s4 1983009808
    %v1681 = vunpack.c.0.s8 %v1680
    %v1682 = vperm.slane %v1676, %v1681
    %v1684 = vunpack.c.l.s4 1983009808
    %v1685 = vunpack.c.0.s8 %v1684
    %v1686 = vperm.slane %v1678, %v1685
    %v1687 = vrot.slane %v1348, 4
    %v1688 = vsel %vm424, %v1687, %v1344
    %v1689 = vrot.slane %v1344, 4
    %v1690 = vsel %vm424, %v1348, %v1689
    %v1692 = vunpack.c.l.s4 1983009808
    %v1693 = vunpack.c.0.s8 %v1692
    %v1694 = vperm.slane %v1688, %v1693
    %v1696 = vunpack.c.l.s4 1983009808
    %v1697 = vunpack.c.0.s8 %v1696
    %v1698 = vperm.slane %v1690, %v1697
    %v1699 = vrot.slane %v1354, 4
    %v1700 = vsel %vm424, %v1699, %v1350
    %v1701 = vrot.slane %v1350, 4
    %v1702 = vsel %vm424, %v1354, %v1701
    %v1704 = vunpack.c.l.s4 1983009808
    %v1705 = vunpack.c.0.s8 %v1704
    %v1706 = vperm.slane %v1700, %v1705
    %v1708 = vunpack.c.l.s4 1983009808
    %v1709 = vunpack.c.0.s8 %v1708
    %v1710 = vperm.slane %v1702, %v1709
    %v1711 = vrot.slane %v1356, 4
    %v1712 = vsel %vm424, %v1711, %v1352
    %v1713 = vrot.slane %v1352, 4
    %v1714 = vsel %vm424, %v1356, %v1713
    %v1716 = vunpack.c.l.s4 1983009808
    %v1717 = vunpack.c.0.s8 %v1716
    %v1718 = vperm.slane %v1712, %v1717
    %v1720 = vunpack.c.l.s4 1983009808
    %v1721 = vunpack.c.0.s8 %v1720
    %v1722 = vperm.slane %v1714, %v1721
    %v1723 = vrot.slane %v1694, 4
    %v1724 = vsel %vm424, %v1723, %v1682
    %v1725 = vrot.slane %v1682, 4
    %v1726 = vsel %vm424, %v1694, %v1725
    %v1728 = vunpack.c.l.s4 1934713408
    %v1729 = vunpack.c.0.s8 %v1728
    %v1730 = vperm.slane %v1724, %v1729
    %v1732 = vunpack.c.l.s4 1934713408
    %v1733 = vunpack.c.0.s8 %v1732
    %v1734 = vperm.slane %v1726, %v1733
    %v1735 = vrot.slane %v1698, 4
    %v1736 = vsel %vm424, %v1735, %v1686
    %v1738 = vunpack.c.l.s4 1934713408
    %v1739 = vunpack.c.0.s8 %v1738
    %v1740 = vperm.slane %v1736, %v1739
    %v1741 = vrot.slane %v1718, 4
    %v1742 = vsel %vm424, %v1741, %v1706
    %v1743 = vrot.slane %v1706, 4
    %v1744 = vsel %vm424, %v1718, %v1743
    %v1746 = vunpack.c.l.s4 1934713408
    %v1747 = vunpack.c.0.s8 %v1746
    %v1748 = vperm.slane %v1742, %v1747
    %v1750 = vunpack.c.l.s4 1934713408
    %v1751 = vunpack.c.0.s8 %v1750
    %v1752 = vperm.slane %v1744, %v1751
    %v1753 = vrot.slane %v1722, 4
    %v1754 = vsel %vm424, %v1753, %v1710
    %v1756 = vunpack.c.l.s4 1934713408
    %v1757 = vunpack.c.0.s8 %v1756
    %v1758 = vperm.slane %v1754, %v1757
    %v1759 = vrot.slane %v1748, 4
    %v1760 = vsel %vm424, %v1759, %v1730
    %v1761 = vrot.slane %v1730, 4
    %v1762 = vsel %vm424, %v1748, %v1761
    %v1763 = vrot.slane %v1752, 4
    %v1764 = vsel %vm424, %v1763, %v1734
    %v1765 = vrot.slane %v1734, 4
    %v1766 = vsel %vm424, %v1752, %v1765
    %v1767 = vrot.slane %v1758, 4
    %v1768 = vsel %vm424, %v1767, %v1740
    %1771 = vrot.lane.b32.xlu0 %v1456, 2
    %v1772 = vpop.permute.xlu0 %1771
    %1773 = vrot.lane.b32.xlu0 %v1662, 2
    %v1774 = vpop.permute.xlu0 %1773
    %1779 = vrot.lane.b32.xlu0 %v1458, 4
    %v1780 = vpop.permute.xlu0 %1779
    %1781 = vrot.lane.b32.xlu0 %v1664, 4
    %v1782 = vpop.permute.xlu0 %1781
    %1787 = vrot.lane.b32.xlu0 %v1460, 6
    %v1788 = vpop.permute.xlu0 %1787
    %1789 = vrot.lane.b32.xlu0 %v1666, 6
    %v1790 = vpop.permute.xlu0 %1789
    %1795 = vrot.lane.b32.xlu0 %v1462, 8
    %v1796 = vpop.permute.xlu0 %1795
    %1797 = vrot.lane.b32.xlu0 %v1668, 8
    %v1798 = vpop.permute.xlu0 %1797
    %1803 = vrot.lane.b32.xlu0 %v1464, 10
    %v1804 = vpop.permute.xlu0 %1803
    %1805 = vrot.lane.b32.xlu0 %v1670, 10
    %v1806 = vpop.permute.xlu0 %1805
    %1811 = vrot.lane.b32.xlu0 %v1466, 12
    %v1812 = vpop.permute.xlu0 %1811
    %1813 = vrot.lane.b32.xlu0 %v1672, 12
    %v1814 = vpop.permute.xlu0 %1813
    %1819 = vrot.lane.b32.xlu0 %v1468, 14
    %v1820 = vpop.permute.xlu0 %1819
    %1821 = vrot.lane.b32.xlu0 %v1674, 14
    %v1822 = vpop.permute.xlu0 %1821
    %1827 = vrot.lane.b32.xlu0 %v1554, 16
    %v1828 = vpop.permute.xlu0 %1827
    %1829 = vrot.lane.b32.xlu0 %v1760, 16
    %v1830 = vpop.permute.xlu0 %1829
    %1835 = vrot.lane.b32.xlu0 %v1556, 18
    %v1836 = vpop.permute.xlu0 %1835
    %1837 = vrot.lane.b32.xlu0 %v1762, 18
    %v1838 = vpop.permute.xlu0 %1837
    %1843 = vrot.lane.b32.xlu0 %v1558, 20
    %v1844 = vpop.permute.xlu0 %1843
    %1845 = vrot.lane.b32.xlu0 %v1764, 20
    %v1846 = vpop.permute.xlu0 %1845
    %1851 = vrot.lane.b32.xlu0 %v1560, 22
    %v1852 = vpop.permute.xlu0 %1851
    %1853 = vrot.lane.b32.xlu0 %v1766, 22
    %v1854 = vpop.permute.xlu0 %1853
    %1859 = vrot.lane.b32.xlu0 %v1562, 24
    %v1860 = vpop.permute.xlu0 %1859
    %1861 = vrot.lane.b32.xlu0 %v1768, 24
    %v1862 = vpop.permute.xlu0 %1861
    %v1865 = vsel %vm692, %v1454, %v1772
    %v1866 = vsel %vm692, %v1660, %v1774
    %v1867 = vsel %vm695, %v1865, %v1780
    %v1868 = vsel %vm695, %v1866, %v1782
    %v1869 = vsel %vm698, %v1867, %v1788
    %v1870 = vsel %vm698, %v1868, %v1790
    %v1871 = vsel %vm701, %v1869, %v1796
    %v1872 = vsel %vm701, %v1870, %v1798
    %v1873 = vsel %vm704, %v1871, %v1804
    %v1874 = vsel %vm704, %v1872, %v1806
    %v1875 = vsel %vm707, %v1873, %v1812
    %v1876 = vsel %vm707, %v1874, %v1814
    %v1877 = vsel %vm711, %v1875, %v1820
    %v1878 = vsel %vm711, %v1876, %v1822
    %v1879 = vsel %vm42, %v1877, %v1828
    %v1880 = vsel %vm42, %v1878, %v1830
    %vm1881 = vcmask 146432
    %v1882 = vsel %vm1881, %v1879, %v1836
    %v1883 = vsel %vm1881, %v1880, %v1838
    %vm1884 = vcmask 162816
    %v1885 = vsel %vm1884, %v1882, %v1844
    %v1886 = vsel %vm1884, %v1883, %v1846
    %vm1887 = vcmask 179200
    %v1888 = vsel %vm1887, %v1885, %v1852
    %v1889 = vsel %vm1887, %v1886, %v1854
    %vm1890 = vcmask 195584
    %v1891 = vsel %vm1890, %v1888, %v1860
    %v1892 = vsel %vm1890, %v1889, %v1862
    %v1893 = vld [vmem:[%s4] sm:$0xff]
    %vm1894 = vcmask 211968
    %v1895 = vsel %vm1894, %v1891, 0.0
    %1896 = vadd.xlane.f32.xlu0 %v1895
    %v1897 = vpop.xlane.xlu0 %1896
    %v1898 = vsel %vm1894, %v1892, 0.0
    %1899 = vadd.xlane.f32.xlu0 %v1898
    %v1900 = vpop.xlane.xlu0 %1899
    %v1901 = vadd.f32 %v1897, %v1900
    %v1902 = vmul.f32 %v1891, %v1891
    %v1903 = vmul.f32 %v1892, %v1892
    %v1904 = vsel %vm1894, %v1902, 0.0
    %1905 = vadd.xlane.f32.xlu0 %v1904
    %v1906 = vpop.xlane.xlu0 %1905
    %v1907 = vsel %vm1894, %v1903, 0.0
    %1908 = vadd.xlane.f32.xlu0 %v1907
    %v1909 = vpop.xlane.xlu0 %1908
    %v1910 = vadd.f32 %v1906, %v1909
    %v1911 = vmul.f32 %v1901, 0.01923077
    %v1912 = vmul.f32 %v1910, 0.01923077
    %v1913 = vmul.f32 %v1911, %v1911
    %v1914 = vsub.f32 %v1912, %v1913
    %v1915 = vmax.f32 %v1914, 0.0
    %v1916 = vadd.f32 %v1915, 1e-05
    %v1917 = vrsqrt.pop %v1916
    %v1918 = vmul.f32 %v1917, %v1916
    %v1919 = vmul.f32 %v1918, %v1917
    %v1920 = vmul.f32 0.5, %v1919
    %v1921 = vsub.f32 1.5, %v1920
    %v1922 = vmul.f32 %v1917, %v1921
    %vm1923 = vweird.f32 %v1916
    %vm1924 = vweird.f32 %v1917
    %vm1925 = vmor %vm1923, %vm1924
    %v1926 = vsel %vm1925, %v1917, %v1922
    %v1927 = vmul.f32 %v1893, %v1926
    %1929 = vset.pattern.permute.xlu0 1
    %1930 = vperm.xlu0 %1929, %v1927
    %v1931 = vpop.permute.xlu0 %1930
    %v1933 = vmul.f32 %v1891, %v1931
    %v1934 = vmul.f32 %v1892, %v1931
    %v1935 = vmul.f32 %v1911, %v1927
    %1937 = vrot.lane.b32.xlu0 %v1935, 1
    %v1938 = vpop.permute.xlu0 %1937
    %v1940 = vsub.f32 %v1893, %v1938
    %1942 = vset.pattern.permute.xlu0 2
    %1943 = vperm.xlu0 %1942, %v1940
    %v1944 = vpop.permute.xlu0 %1943
    %v1946 = vadd.f32 %v1933, %v1944
    %v1947 = vadd.f32 %v1934, %v1944
    %v1948 = vmax.f32 %v1946, 0.0
    %v1949 = vmax.f32 %v1947, 0.0
    %v1950 = vld [vmem:[%s5] sm:$0xff]
    %v1951 = vld [vmem:[%s5 + $0x8] sm:$0xff]
    %v1952 = vld [vmem:[%s6] sm:$0xff]
    %v1953 = vld [vmem:[%s6 + $0x8] sm:$0xff]
    %1955 = vset.pattern.permute.xlu0 0
    %1956 = vperm.xlu0 %1955, %v1952
    %v1957 = vpop.permute.xlu0 %1956
    %1960 = vset.pattern.permute.xlu0 0
    %1961 = vperm.xlu0 %1960, %v1953
    %v1962 = vpop.permute.xlu0 %1961
    %v1965 = vsel %vm701, %v1950, 0
    %v1968 = vsel %vm701, %v1951, 0
    %1970 = vmatpush.msra.mxu0 0.0
    %1971 = vmatpush.msra.mxu0 0.0
    %1972 = vmatpush.msra.mxu0 0.0
    %1973 = vmatpush.msra.mxu0 0.0
    %1974 = vmatpush.msra.mxu0 0.0
    %1975 = vmatpush.msra.mxu0 0.0
    %1976 = vmatpush.msra.mxu0 0.0
    %1977 = vmatpush.msra.mxu0 0.0
    %1978 = vmatpush.msra.mxu0 0.0
    %1979 = vmatpush.msra.mxu0 0.0
    %1980 = vmatpush.msra.mxu0 0.0
    %1981 = vmatpush.msra.mxu0 0.0
    %1982 = vmatpush.msra.mxu0 0.0
    %1983 = vmatpush.msra.mxu0 0.0
    %1984 = vmatpush.msra.mxu0 0.0
    %1985 = vmatpush.msra.mxu0 %v1948
    %1986 = vmatmul.f32.gmra.mxu0 %v1965
    %v1987 = vpop.f32.mrf.mxu0
    %v1988 = vadd.f32 %v1957, %v1987
    %1989 = vmatmul.f32.gmra.mxu0 %v1968
    %v1990 = vpop.f32.mrf.mxu0
    %v1991 = vadd.f32 %v1962, %v1990
    %1992 = vdwg.mxu0
    %1993 = vmatpush.msra.mxu0 0.0
    %1994 = vmatpush.msra.mxu0 0.0
    %1995 = vmatpush.msra.mxu0 0.0
    %1996 = vmatpush.msra.mxu0 0.0
    %1997 = vmatpush.msra.mxu0 0.0
    %1998 = vmatpush.msra.mxu0 0.0
    %1999 = vmatpush.msra.mxu0 0.0
    %2000 = vmatpush.msra.mxu0 0.0
    %2001 = vmatpush.msra.mxu0 0.0
    %2002 = vmatpush.msra.mxu0 0.0
    %2003 = vmatpush.msra.mxu0 0.0
    %2004 = vmatpush.msra.mxu0 0.0
    %2005 = vmatpush.msra.mxu0 0.0
    %2006 = vmatpush.msra.mxu0 0.0
    %2007 = vmatpush.msra.mxu0 0.0
    %2008 = vmatpush.msra.mxu0 %v1949
    %2009 = vmatmul.f32.gmra.mxu0 %v1965
    %v2010 = vpop.f32.mrf.mxu0
    %v2011 = vadd.f32 %v1957, %v2010
    %2012 = vmatmul.f32.gmra.mxu0 %v1968
    %v2013 = vpop.f32.mrf.mxu0
    %v2014 = vadd.f32 %v1962, %v2013
    %2015 = vdwg.mxu0
    %v2016 = vmul.f32 %v1988, 0.5
    %v2017 = vmul.f32 %v1991, 0.5
    %v2018 = vmul.f32 %v2011, 0.5
    %v2019 = vmul.f32 %v2014, 0.5
    %v2020 = vtanh.pop %v2016
    %v2021 = vtanh.pop %v2017
    %v2022 = vtanh.pop %v2018
    %v2023 = vtanh.pop %v2019
    %v2024 = vadd.f32 %v2020, 1.0
    %v2025 = vadd.f32 %v2021, 1.0
    %v2026 = vadd.f32 %v2022, 1.0
    %v2027 = vadd.f32 %v2023, 1.0
    %v2028 = vmul.f32 %v2024, 0.5
    %v2029 = vmul.f32 %v2025, 0.5
    %v2030 = vmul.f32 %v2026, 0.5
    %v2031 = vmul.f32 %v2027, 0.5
    %v2032 = vsel %vm1894, %v2028, 0.0
    %v2033 = vsel %vm1894, %v2029, 0.0
    %v2034 = vsel %vm1894, %v2030, 0.0
    %v2035 = vsel %vm1894, %v2031, 0.0
    %2036 = vst [vmem:[#allocation2] sm:$0xff] %v2032
    %2037 = vst [vmem:[#allocation2 + $0x8] sm:$0xff] %v2033
    %2038 = vst [vmem:[#allocation2 + $0x10] sm:$0xff] %v2034
    %2039 = vst [vmem:[#allocation2 + $0x18] sm:$0xff] %v2035
    // Predicated region
    $region30: #{tpu_custom_call.1} parent=1 // pred_check
      _
    $region31: #{tpu_custom_call.1} parent=1 // pred_check_branch
      %2041 = sbr.rel (0) target = $region33
    $region32: #{tpu_custom_call.1} parent=1 // pred_region
      %2043 = vsyncadd [#allocation3], 0
      %s2044 = sshll.u32 [#allocation2], 4
      %s2045 = int_to_ptr.vmem [resolvable:$true] %s2044
      %s2046 = sshll.u32 %s7, 4
      %s2047 = int_to_ptr.hbm [resolvable:$true] %s2046
      %2052 = dma.vmem_to_hbm [thread:$0]  %s2045, 512, %s2047, [#allocation3], 128, 128, 8
    $region33: #{tpu_custom_call.1} parent=1 // pred_fallthru
      _
    // Predicated region
    $region34: #{tpu_custom_call.1} parent=1 // pred_check
      _
    $region35: #{tpu_custom_call.1} parent=1 // pred_check_branch
      %2054 = sbr.rel (0) target = $region37
    $region36: #{tpu_custom_call.1} parent=1 // pred_region
      %2056 = dma.done [#allocation3], 512
    $region37: #{tpu_custom_call.1} parent=1 // pred_fallthru
      _
    %2057 = vsyncpa [#allocation3], 1

</llo_original>
